<compile_context>
chip_gen: v6e
topology: v6e:2x2x1
jax: 0.10.0
libtpu: 0.0.40
codegen_flags: <defaults>
</compile_context>

<pallas_src>
import jax
import jax.numpy as jnp
from jax.experimental import pallas as pl
from jax.experimental.pallas import tpu as pltpu


def _pooled_mean_f32(x_ref):
    """Spatial mean over the HW (lane) axis with f32 accumulation.

    For f32 inputs jnp.mean reduces in place.  For sub-f32 inputs we chunk the
    HW axis and accumulate in a small (Nb, C) f32 buffer so the lowering never
    needs a full f32 copy of the (Nb, C, HW) block (protects the VMEM budget,
    especially on v7x's 64 MiB).
    """
    nb, c, hw = x_ref.shape
    if x_ref.dtype == jnp.float32:
        return jnp.mean(x_ref[...], axis=2, dtype=jnp.float32)

    chunk = hw
    for cand in (2048, 1024, 512, 256, 128):
        if hw % cand == 0:
            chunk = cand
            break
    n_chunks = hw // chunk
    if n_chunks <= 1:
        return jnp.mean(x_ref[...], axis=2, dtype=jnp.float32)

    def body(i, acc):
        off = pl.multiple_of(i * chunk, chunk)
        blk = x_ref[:, :, pl.ds(off, chunk)].astype(jnp.float32)
        return acc + jnp.sum(blk, axis=2)

    acc = jax.lax.fori_loop(0, n_chunks, body, jnp.zeros((nb, c), jnp.float32))
    return acc * (1.0 / hw)


def _se_kernel(x_ref, w1t_ref, b1_ref, w2t_ref, b2_ref, o_ref):
    # x_ref block: (Nb, C, HW) -- NCHW-native, HW on lanes.
    pooled = _pooled_mean_f32(x_ref)                                   # (Nb, C) f32

    # Excite: two 1x1 "convs" as tiny row-vector matmuls on the MXU.
    y1 = jnp.dot(pooled, w1t_ref[...], preferred_element_type=jnp.float32)
    s1 = jax.nn.sigmoid(y1 + b1_ref[...])                              # (Nb, C_r)
    y2 = jnp.dot(s1, w2t_ref[...], preferred_element_type=jnp.float32)
    gate = jax.nn.sigmoid(y2 + b2_ref[...])                            # (Nb, C)

    # Scale: broadcast gate over the spatial (lane) axis; store in input dtype.
    o_ref[...] = x_ref[...] * gate[:, :, None].astype(o_ref.dtype)


def _tpu_vmem_and_multicore():
    """(vmem_capacity_bytes, is_multicore_chip).  64 MiB VMEM ~ v7x (2 TCs)."""
    vmem_cap = 128 * 1024 * 1024
    try:
        vmem_cap = int(pltpu.get_tpu_info().vmem_capacity_bytes)
    except Exception:
        pass
    return vmem_cap, vmem_cap <= 64 * 1024 * 1024


def _pick_block_n(n, c, hw, itemsize, vmem_cap, multi_core):
    """Largest batch-rows-per-step that (a) fits a ~30% VMEM slab budget,
    (b) divides N (so no pad pass), (c) leaves >=2 grid steps on 2-TC chips."""
    slab_budget = int(vmem_cap * 0.30)
    per_row = 4 * c * hw * itemsize              # in + out slabs, double-buffered
    nb_cap = max(1, min(n, slab_budget // max(per_row, 1)))
    if multi_core and n >= 2:
        nb_cap = min(nb_cap, max(1, n // 2))     # expose >=2 steps for both TCs
    for nb in range(nb_cap, 0, -1):              # prefer a divisor of N: no padding
        if n % nb == 0:
            return nb
    return 1


def se_module(x_nchw, w1, b1, w2, b2, *, block_n=None):
    """SE forward.

    x_nchw: (N, C, H, W)
    w1: (C_r, C)   fc1.weight (squeezed 1x1 conv)      b1: (C_r,)
    w2: (C, C_r)   fc2.weight (squeezed 1x1 conv)      b2: (C,)
    """
    n, c, h, w = x_nchw.shape
    c_r = w1.shape[0]
    hw = h * w

    # NCHW-native: free reshape only, HW lands on the lane axis.
    x = x_nchw.reshape(n, c, hw)

    # Row-vector weight/bias layout for the excitation matmuls.
    w1t = jnp.asarray(w1).reshape(c_r, c).T.astype(jnp.float32)   # (C, C_r)
    w2t = jnp.asarray(w2).reshape(c, c_r).T.astype(jnp.float32)   # (C_r, C)
    b1r = jnp.asarray(b1).reshape(1, c_r).astype(jnp.float32)
    b2r = jnp.asarray(b2).reshape(1, c).astype(jnp.float32)

    itemsize = jnp.dtype(x_nchw.dtype).itemsize
    vmem_cap, multi_core = _tpu_vmem_and_multicore()
    vmem_limit = int(vmem_cap * 0.625)           # ~40 MiB on v7x, ~80 MiB on v5e/v6e

    per_row = 4 * c * hw * itemsize
    weight_bytes = 2 * 4 * (c * c_r + c_r * c + c + c_r)
    if per_row + weight_bytes > int(vmem_limit * 0.9):
        # TODO(synk): spatially-chunked two-pass fallback for huge H*W*C/sample.
        raise ValueError(
            "A single sample's SE slab does not fit the VMEM budget; "
            "spatial chunking is not implemented.")

    if block_n is None:
        block_n = _pick_block_n(n, c, hw, itemsize, vmem_cap, multi_core)
    n_blocks = pl.cdiv(n, block_n)
    n_pad = n_blocks * block_n
    if n_pad != n:                               # only for user-forced block_n
        x = jnp.pad(x, ((0, n_pad - n), (0, 0), (0, 0)))

    cost = pl.CostEstimate(
        flops=int(4 * n * c * c_r + 2 * n * c * hw),
        transcendentals=int(n * (c + c_r)),
        bytes_accessed=int(2 * n * c * hw * itemsize),
    )

    out = pl.pallas_call(
        _se_kernel,
        out_shape=jax.ShapeDtypeStruct((n_pad, c, hw), x_nchw.dtype),
        grid_spec=pltpu.PrefetchScalarGridSpec(
            num_scalar_prefetch=0,
            grid=(n_blocks,),
            in_specs=[
                pl.BlockSpec((block_n, c, hw), lambda i: (i, 0, 0)),
                pl.BlockSpec((c, c_r), lambda i: (0, 0)),
                pl.BlockSpec((1, c_r), lambda i: (0, 0)),
                pl.BlockSpec((c_r, c), lambda i: (0, 0)),
                pl.BlockSpec((1, c), lambda i: (0, 0)),
            ],
            out_specs=pl.BlockSpec((block_n, c, hw), lambda i: (i, 0, 0)),
        ),
        compiler_params=pltpu.CompilerParams(
            dimension_semantics=("parallel",),
            vmem_limit_bytes=vmem_limit,
        ),
        cost_estimate=cost,
    )(x, w1t, b1r, w2t, b2r)

    return out[:n].reshape(n, c, h, w)


def se_module_ref(x_nchw, w1, b1, w2, b2):
    """Pure-JAX reference matching the PyTorch forward (sigmoid after both fcs)."""
    xf = x_nchw.astype(jnp.float32)
    pooled = jnp.mean(xf, axis=(2, 3))                      # (N, C)
    s1 = jax.nn.sigmoid(pooled @ w1.T + b1)                 # (N, C_r)
    gate = jax.nn.sigmoid(s1 @ w2.T + b2)                   # (N, C)
    return (xf * gate[:, :, None, None]).astype(x_nchw.dtype)


if __name__ == "__main__":
    N, C, H, W = 4, 128, 16, 16
    reduction = 16
    C_R = C // reduction

    key = jax.random.PRNGKey(0)
    kx, k1, k2, k3, k4 = jax.random.split(key, 5)

    x = jax.random.normal(kx, (N, C, H, W), dtype=jnp.float32)

    # 1x1 conv parameters (squeezed): fc1.weight (C_r,C,1,1)->(C_r,C), fc1.bias (C_r,), etc.
    w1 = 0.1 * jax.random.normal(k1, (C_R, C), dtype=jnp.float32)
    b1 = 0.1 * jax.random.normal(k2, (C_R,), dtype=jnp.float32)
    w2 = 0.1 * jax.random.normal(k3, (C, C_R), dtype=jnp.float32)
    b2 = 0.1 * jax.random.normal(k4, (C,), dtype=jnp.float32)

    out = jax.block_until_ready(se_module(x, w1, b1, w2, b2))
    ref = se_module_ref(x, w1, b1, w2, b2)

    assert out.shape == (N, C, H, W)
    assert jnp.allclose(out, ref, atol=1e-5, rtol=1e-5), "mismatch vs reference"

    print("KERNEL_OK")
</pallas_src>

<mosaic_0001>
module attributes {stable_mosaic.version = 11 : i64} {
  func.func @_se_kernel(%arg0: i32, %arg1: memref<4x128x256xf32, #tpu.memory_space<vmem>>, %arg2: memref<128x8xf32, #tpu.memory_space<vmem>>, %arg3: memref<1x8xf32, #tpu.memory_space<vmem>>, %arg4: memref<8x128xf32, #tpu.memory_space<vmem>>, %arg5: memref<1x128xf32, #tpu.memory_space<vmem>>, %arg6: memref<4x128x256xf32, #tpu.memory_space<vmem>>) attributes {dimension_semantics = [#tpu.dimension_semantics<parallel>], iteration_bounds = array<i64: 1>, scalar_prefetch = 0 : i64, scratch_operands = 0 : i64, tpu.core_type = #tpu.core_type<tc>, window_params = [{transform_indices = @transform_0, window_bounds = array<i64: 4, 128, 256>}, {pipeline_mode = #tpu.pipeline_mode<synchronous>, transform_indices = @transform_1, window_bounds = array<i64: 128, 8>}, {pipeline_mode = #tpu.pipeline_mode<synchronous>, transform_indices = @transform_2, window_bounds = array<i64: 1, 8>}, {pipeline_mode = #tpu.pipeline_mode<synchronous>, transform_indices = @transform_3, window_bounds = array<i64: 8, 128>}, {pipeline_mode = #tpu.pipeline_mode<synchronous>, transform_indices = @transform_4, window_bounds = array<i64: 1, 128>}, {transform_indices = @transform_5, window_bounds = array<i64: 4, 128, 256>}]} {
    %c0 = arith.constant 0 : index
    %c0_0 = arith.constant 0 : index
    %c0_1 = arith.constant 0 : index
    %0 = vector.load %arg1[%c0, %c0_0, %c0_1] : memref<4x128x256xf32, #tpu.memory_space<vmem>>, vector<4x128x256xf32>
    %cst = arith.constant dense<0.000000e+00> : vector<4x128xf32>
    %1 = vector.multi_reduction <add>, %0, %cst [2] : vector<4x128x256xf32> to vector<4x128xf32>
    %cst_2 = arith.constant 2.560000e+02 : f32
    %2 = vector.broadcast %cst_2 : f32 to vector<4x128xf32>
    %3 = arith.divf %1, %2 : vector<4x128xf32>
    %c0_3 = arith.constant 0 : index
    %c0_4 = arith.constant 0 : index
    %4 = vector.load %arg2[%c0_3, %c0_4] : memref<128x8xf32, #tpu.memory_space<vmem>>, vector<128x8xf32>
    %cst_5 = arith.constant dense<0.000000e+00> : vector<4x8xf32>
    %5 = tpu.matmul %3, %4, %cst_5 {dimension_numbers = #tpu.dot_dimension_numbers<[1], [0], [0], [1], [0, 0, 1, 1], [], []>} : vector<4x128xf32>, vector<128x8xf32>, vector<4x8xf32> -> vector<4x8xf32>
    %c0_6 = arith.constant 0 : index
    %c0_7 = arith.constant 0 : index
    %6 = vector.load %arg3[%c0_6, %c0_7] : memref<1x8xf32, #tpu.memory_space<vmem>>, vector<1x8xf32>
    %7 = vector.broadcast %6 : vector<1x8xf32> to vector<4x8xf32>
    %8 = arith.addf %5, %7 : vector<4x8xf32>
    %9 = arith.negf %8 : vector<4x8xf32>
    %10 = math.exp %9 : vector<4x8xf32>
    %cst_8 = arith.constant 1.000000e+00 : f32
    %11 = vector.broadcast %cst_8 : f32 to vector<4x8xf32>
    %12 = arith.addf %11, %10 : vector<4x8xf32>
    %13 = arith.divf %11, %12 : vector<4x8xf32>
    %c0_9 = arith.constant 0 : index
    %c0_10 = arith.constant 0 : index
    %14 = vector.load %arg4[%c0_9, %c0_10] : memref<8x128xf32, #tpu.memory_space<vmem>>, vector<8x128xf32>
    %cst_11 = arith.constant dense<0.000000e+00> : vector<4x128xf32>
    %15 = tpu.matmul %13, %14, %cst_11 {dimension_numbers = #tpu.dot_dimension_numbers<[1], [0], [0], [1], [0, 0, 1, 1], [], []>} : vector<4x8xf32>, vector<8x128xf32>, vector<4x128xf32> -> vector<4x128xf32>
    %c0_12 = arith.constant 0 : index
    %c0_13 = arith.constant 0 : index
    %16 = vector.load %arg5[%c0_12, %c0_13] : memref<1x128xf32, #tpu.memory_space<vmem>>, vector<1x128xf32>
    %17 = vector.broadcast %16 : vector<1x128xf32> to vector<4x128xf32>
    %18 = arith.addf %15, %17 : vector<4x128xf32>
    %19 = arith.negf %18 : vector<4x128xf32>
    %20 = math.exp %19 : vector<4x128xf32>
    %cst_14 = arith.constant 1.000000e+00 : f32
    %21 = vector.broadcast %cst_14 : f32 to vector<4x128xf32>
    %22 = arith.addf %21, %20 : vector<4x128xf32>
    %23 = arith.divf %21, %22 : vector<4x128xf32>
    %c0_15 = arith.constant 0 : index
    %c0_16 = arith.constant 0 : index
    %c0_17 = arith.constant 0 : index
    %24 = vector.load %arg1[%c0_15, %c0_16, %c0_17] : memref<4x128x256xf32, #tpu.memory_space<vmem>>, vector<4x128x256xf32>
    %25 = vector.shape_cast %23 : vector<4x128xf32> to vector<4x128x1xf32>
    %26 = vector.broadcast %25 : vector<4x128x1xf32> to vector<4x128x256xf32>
    %27 = arith.mulf %24, %26 : vector<4x128x256xf32>
    %c0_18 = arith.constant 0 : index
    %c0_19 = arith.constant 0 : index
    %c0_20 = arith.constant 0 : index
    %28 = vector.load %arg6[%c0_18, %c0_19, %c0_20] : memref<4x128x256xf32, #tpu.memory_space<vmem>>, vector<4x128x256xf32>
    tpu.vector_store %arg6[%c0_18, %c0_19, %c0_20], %27 {strides = array<i32>} : memref<4x128x256xf32, #tpu.memory_space<vmem>>, vector<4x128x256xf32>,
    return
  }
  func.func @transform_0(%arg0: i32) -> (i32, i32, i32) {
    %c0_i32 = arith.constant 0 : i32
    %c0_i32_0 = arith.constant 0 : i32
    %c0_i32_1 = arith.constant 0 : i32
    return %arg0, %c0_i32, %c0_i32_0 : i32, i32, i32
  }
  func.func @transform_1(%arg0: i32) -> (i32, i32) {
    %c0_i32 = arith.constant 0 : i32
    %c0_i32_0 = arith.constant 0 : i32
    %c0_i32_1 = arith.constant 0 : i32
    return %c0_i32, %c0_i32_0 : i32, i32
  }
  func.func @transform_2(%arg0: i32) -> (i32, i32) {
    %c0_i32 = arith.constant 0 : i32
    %c0_i32_0 = arith.constant 0 : i32
    %c0_i32_1 = arith.constant 0 : i32
    return %c0_i32, %c0_i32_0 : i32, i32
  }
  func.func @transform_3(%arg0: i32) -> (i32, i32) {
    %c0_i32 = arith.constant 0 : i32
    %c0_i32_0 = arith.constant 0 : i32
    %c0_i32_1 = arith.constant 0 : i32
    return %c0_i32, %c0_i32_0 : i32, i32
  }
  func.func @transform_4(%arg0: i32) -> (i32, i32) {
    %c0_i32 = arith.constant 0 : i32
    %c0_i32_0 = arith.constant 0 : i32
    %c0_i32_1 = arith.constant 0 : i32
    return %c0_i32, %c0_i32_0 : i32, i32
  }
  func.func @transform_5(%arg0: i32) -> (i32, i32, i32) {
    %c0_i32 = arith.constant 0 : i32
    %c0_i32_0 = arith.constant 0 : i32
    %c0_i32_1 = arith.constant 0 : i32
    return %arg0, %c0_i32, %c0_i32_0 : i32, i32, i32
  }
}

</mosaic_0001>

<llo_original>
// kernel: tpu_custom_call.1
$region0: #{tpu_custom_call.1}
  #allocation0 [shape = 'u32[]', space=smem, size = 0x4, offset = 0x4, fixed_abs, tag = 'smem constant byte address 0x4 - core index']
  #allocation1 [shape = 'u32[144,128]{1,0:T(1,128)}', space=vmem, size = 0x12000, scoped, tag = 'internal scratch']
  %s0 = inlined_call_operand.hbm [shape: f32[4,128,256], index: 0, kind: input, shape index: {}]
  %s1 = inlined_call_operand.vmem [shape: f32[128,8], index: 1, kind: input, shape index: {}]
  %s2 = inlined_call_operand.vmem [shape: f32[1,8], index: 2, kind: input, shape index: {}]
  %s3 = inlined_call_operand.vmem [shape: f32[8,128], index: 3, kind: input, shape index: {}]
  %s4 = inlined_call_operand.vmem [shape: f32[1,128], index: 4, kind: input, shape index: {}]
  %s5 = inlined_call_operand.hbm [shape: f32[4,128,256], index: 5, kind: output, shape index: {}]
  %s6 = sld [smem:[#allocation0]]
  $region34: #{tpu_custom_call.1} parent=0
    _
  %s8 = ssub.s32 1, %s6
  %s9 = scalar_select 0, %s8, %s6
  $region1: #{tpu_custom_call.1} parent=0
    #allocation2 [shape = 'u8[524288]{0}', space=vmem, size = 0x80000, scoped, tag = 'input window, operand 0, single buffered']
    #allocation3 [shape = 's32[1]{0}', space=sflag, size = 0x4, scoped, tag = 'scoped memory for tpu_custom_call.1']
    #allocation4 [shape = 's32[1]{0}', space=sflag, size = 0x4, scoped, tag = 'scoped memory for tpu_custom_call.1']
    #allocation5 [shape = 'u8[524288]{0}', space=vmem, size = 0x80000, scoped, tag = 'output window, operand 0, single buffered']
    %10 = vsyncpa [#allocation3], 0
    %11 = vsyncpa [#allocation4], 0
    // Predicated region
    $region2: #{tpu_custom_call.1} parent=1 // pred_check
      _
    $region3: #{tpu_custom_call.1} parent=1 // pred_check_branch
      %13 = sbr.rel (0) target = $region5
    $region4: #{tpu_custom_call.1} parent=1 // pred_region
      %s15 = ssub.s32 16384, 16384
      %16 = vsyncadd [#allocation3], %s15
      %s17 = sshll.u32 [#allocation2], 4
      %s18 = int_to_ptr.vmem [resolvable:$true] %s17
      %23 = dma.hbm_to_vmem [thread:$0]  %s0, 16384, %s18, [#allocation3], 256, 256, 16
    $region5: #{tpu_custom_call.1} parent=1 // pred_fallthru
      _
    // Predicated region
    $region6: #{tpu_custom_call.1} parent=1 // pred_check
      _
    $region7: #{tpu_custom_call.1} parent=1 // pred_check_branch
      %25 = sbr.rel (0) target = $region9
    $region8: #{tpu_custom_call.1} parent=1 // pred_region
      _
    $region9: #{tpu_custom_call.1} parent=1 // pred_fallthru
      _
    // Predicated region
    $region10: #{tpu_custom_call.1} parent=1 // pred_check
      _
    $region11: #{tpu_custom_call.1} parent=1 // pred_check_branch
      %27 = sbr.rel (0) target = $region13
    $region12: #{tpu_custom_call.1} parent=1 // pred_region
      _
    $region13: #{tpu_custom_call.1} parent=1 // pred_fallthru
      _
    // Predicated region
    $region14: #{tpu_custom_call.1} parent=1 // pred_check
      _
    $region15: #{tpu_custom_call.1} parent=1 // pred_check_branch
      %29 = sbr.rel (0) target = $region17
    $region16: #{tpu_custom_call.1} parent=1 // pred_region
      _
    $region17: #{tpu_custom_call.1} parent=1 // pred_fallthru
      _
    // Predicated region
    $region18: #{tpu_custom_call.1} parent=1 // pred_check
      _
    $region19: #{tpu_custom_call.1} parent=1 // pred_check_branch
      %31 = sbr.rel (0) target = $region21
    $region20: #{tpu_custom_call.1} parent=1 // pred_region
      _
    $region21: #{tpu_custom_call.1} parent=1 // pred_fallthru
      _
    // Predicated region
    $region22: #{tpu_custom_call.1} parent=1 // pred_check
      _
    $region23: #{tpu_custom_call.1} parent=1 // pred_check_branch
      %33 = sbr.rel (0) target = $region25
    $region24: #{tpu_custom_call.1} parent=1 // pred_region
      %34 = dma.done [#allocation3], 16384
    $region25: #{tpu_custom_call.1} parent=1 // pred_fallthru
      _
    %v35 = vld [vmem:[#allocation2] sm:$0xff]
    %v36 = vld [vmem:[#allocation2 + $0x8] sm:$0xff]
    %v37 = vld [vmem:[#allocation2 + $0x10] sm:$0xff]
    %v38 = vld [vmem:[#allocation2 + $0x18] sm:$0xff]
    %v39 = vld [vmem:[#allocation2 + $0x20] sm:$0xff]
    %v40 = vld [vmem:[#allocation2 + $0x28] sm:$0xff]
    %v41 = vld [vmem:[#allocation2 + $0x30] sm:$0xff]
    %v42 = vld [vmem:[#allocation2 + $0x38] sm:$0xff]
    %v43 = vld [vmem:[#allocation2 + $0x40] sm:$0xff]
    %v44 = vld [vmem:[#allocation2 + $0x48] sm:$0xff]
    %v45 = vld [vmem:[#allocation2 + $0x50] sm:$0xff]
    %v46 = vld [vmem:[#allocation2 + $0x58] sm:$0xff]
    %v47 = vld [vmem:[#allocation2 + $0x60] sm:$0xff]
    %v48 = vld [vmem:[#allocation2 + $0x68] sm:$0xff]
    %v49 = vld [vmem:[#allocation2 + $0x70] sm:$0xff]
    %v50 = vld [vmem:[#allocation2 + $0x78] sm:$0xff]
    %v51 = vld [vmem:[#allocation2 + $0x80] sm:$0xff]
    %v52 = vld [vmem:[#allocation2 + $0x88] sm:$0xff]
    %v53 = vld [vmem:[#allocation2 + $0x90] sm:$0xff]
    %v54 = vld [vmem:[#allocation2 + $0x98] sm:$0xff]
    %v55 = vld [vmem:[#allocation2 + $0xa0] sm:$0xff]
    %v56 = vld [vmem:[#allocation2 + $0xa8] sm:$0xff]
    %v57 = vld [vmem:[#allocation2 + $0xb0] sm:$0xff]
    %v58 = vld [vmem:[#allocation2 + $0xb8] sm:$0xff]
    %v59 = vld [vmem:[#allocation2 + $0xc0] sm:$0xff]
    %v60 = vld [vmem:[#allocation2 + $0xc8] sm:$0xff]
    %v61 = vld [vmem:[#allocation2 + $0xd0] sm:$0xff]
    %v62 = vld [vmem:[#allocation2 + $0xd8] sm:$0xff]
    %v63 = vld [vmem:[#allocation2 + $0xe0] sm:$0xff]
    %v64 = vld [vmem:[#allocation2 + $0xe8] sm:$0xff]
    %v65 = vld [vmem:[#allocation2 + $0xf0] sm:$0xff]
    %v66 = vld [vmem:[#allocation2 + $0xf8] sm:$0xff]
    %v67 = vld [vmem:[#allocation2 + $0x100] sm:$0xff]
    %v68 = vld [vmem:[#allocation2 + $0x108] sm:$0xff]
    %v69 = vld [vmem:[#allocation2 + $0x110] sm:$0xff]
    %v70 = vld [vmem:[#allocation2 + $0x118] sm:$0xff]
    %v71 = vld [vmem:[#allocation2 + $0x120] sm:$0xff]
    %v72 = vld [vmem:[#allocation2 + $0x128] sm:$0xff]
    %v73 = vld [vmem:[#allocation2 + $0x130] sm:$0xff]
    %v74 = vld [vmem:[#allocation2 + $0x138] sm:$0xff]
    %v75 = vld [vmem:[#allocation2 + $0x140] sm:$0xff]
    %v76 = vld [vmem:[#allocation2 + $0x148] sm:$0xff]
    %v77 = vld [vmem:[#allocation2 + $0x150] sm:$0xff]
    %v78 = vld [vmem:[#allocation2 + $0x158] sm:$0xff]
    %v79 = vld [vmem:[#allocation2 + $0x160] sm:$0xff]
    %v80 = vld [vmem:[#allocation2 + $0x168] sm:$0xff]
    %v81 = vld [vmem:[#allocation2 + $0x170] sm:$0xff]
    %v82 = vld [vmem:[#allocation2 + $0x178] sm:$0xff]
    %v83 = vld [vmem:[#allocation2 + $0x180] sm:$0xff]
    %v84 = vld [vmem:[#allocation2 + $0x188] sm:$0xff]
    %v85 = vld [vmem:[#allocation2 + $0x190] sm:$0xff]
    %v86 = vld [vmem:[#allocation2 + $0x198] sm:$0xff]
    %v87 = vld [vmem:[#allocation2 + $0x1a0] sm:$0xff]
    %v88 = vld [vmem:[#allocation2 + $0x1a8] sm:$0xff]
    %v89 = vld [vmem:[#allocation2 + $0x1b0] sm:$0xff]
    %v90 = vld [vmem:[#allocation2 + $0x1b8] sm:$0xff]
    %v91 = vld [vmem:[#allocation2 + $0x1c0] sm:$0xff]
    %v92 = vld [vmem:[#allocation2 + $0x1c8] sm:$0xff]
    %v93 = vld [vmem:[#allocation2 + $0x1d0] sm:$0xff]
    %v94 = vld [vmem:[#allocation2 + $0x1d8] sm:$0xff]
    %v95 = vld [vmem:[#allocation2 + $0x1e0] sm:$0xff]
    %v96 = vld [vmem:[#allocation2 + $0x1e8] sm:$0xff]
    %v97 = vld [vmem:[#allocation2 + $0x1f0] sm:$0xff]
    %v98 = vld [vmem:[#allocation2 + $0x1f8] sm:$0xff]
    %v99 = vld [vmem:[#allocation2 + $0x200] sm:$0xff]
    %v100 = vld [vmem:[#allocation2 + $0x208] sm:$0xff]
    %v101 = vld [vmem:[#allocation2 + $0x210] sm:$0xff]
    %v102 = vld [vmem:[#allocation2 + $0x218] sm:$0xff]
    %v103 = vld [vmem:[#allocation2 + $0x220] sm:$0xff]
    %v104 = vld [vmem:[#allocation2 + $0x228] sm:$0xff]
    %v105 = vld [vmem:[#allocation2 + $0x230] sm:$0xff]
    %v106 = vld [vmem:[#allocation2 + $0x238] sm:$0xff]
    %v107 = vld [vmem:[#allocation2 + $0x240] sm:$0xff]
    %v108 = vld [vmem:[#allocation2 + $0x248] sm:$0xff]
    %v109 = vld [vmem:[#allocation2 + $0x250] sm:$0xff]
    %v110 = vld [vmem:[#allocation2 + $0x258] sm:$0xff]
    %v111 = vld [vmem:[#allocation2 + $0x260] sm:$0xff]
    %v112 = vld [vmem:[#allocation2 + $0x268] sm:$0xff]
    %v113 = vld [vmem:[#allocation2 + $0x270] sm:$0xff]
    %v114 = vld [vmem:[#allocation2 + $0x278] sm:$0xff]
    %v115 = vld [vmem:[#allocation2 + $0x280] sm:$0xff]
    %v116 = vld [vmem:[#allocation2 + $0x288] sm:$0xff]
    %v117 = vld [vmem:[#allocation2 + $0x290] sm:$0xff]
    %v118 = vld [vmem:[#allocation2 + $0x298] sm:$0xff]
    %v119 = vld [vmem:[#allocation2 + $0x2a0] sm:$0xff]
    %v120 = vld [vmem:[#allocation2 + $0x2a8] sm:$0xff]
    %v121 = vld [vmem:[#allocation2 + $0x2b0] sm:$0xff]
    %v122 = vld [vmem:[#allocation2 + $0x2b8] sm:$0xff]
    %v123 = vld [vmem:[#allocation2 + $0x2c0] sm:$0xff]
    %v124 = vld [vmem:[#allocation2 + $0x2c8] sm:$0xff]
    %v125 = vld [vmem:[#allocation2 + $0x2d0] sm:$0xff]
    %v126 = vld [vmem:[#allocation2 + $0x2d8] sm:$0xff]
    %v127 = vld [vmem:[#allocation2 + $0x2e0] sm:$0xff]
    %v128 = vld [vmem:[#allocation2 + $0x2e8] sm:$0xff]
    %v129 = vld [vmem:[#allocation2 + $0x2f0] sm:$0xff]
    %v130 = vld [vmem:[#allocation2 + $0x2f8] sm:$0xff]
    %v131 = vld [vmem:[#allocation2 + $0x300] sm:$0xff]
    %v132 = vld [vmem:[#allocation2 + $0x308] sm:$0xff]
    %v133 = vld [vmem:[#allocation2 + $0x310] sm:$0xff]
    %v134 = vld [vmem:[#allocation2 + $0x318] sm:$0xff]
    %v135 = vld [vmem:[#allocation2 + $0x320] sm:$0xff]
    %v136 = vld [vmem:[#allocation2 + $0x328] sm:$0xff]
    %v137 = vld [vmem:[#allocation2 + $0x330] sm:$0xff]
    %v138 = vld [vmem:[#allocation2 + $0x338] sm:$0xff]
    %v139 = vld [vmem:[#allocation2 + $0x340] sm:$0xff]
    %v140 = vld [vmem:[#allocation2 + $0x348] sm:$0xff]
    %v141 = vld [vmem:[#allocation2 + $0x350] sm:$0xff]
    %v142 = vld [vmem:[#allocation2 + $0x358] sm:$0xff]
    %v143 = vld [vmem:[#allocation2 + $0x360] sm:$0xff]
    %v144 = vld [vmem:[#allocation2 + $0x368] sm:$0xff]
    %v145 = vld [vmem:[#allocation2 + $0x370] sm:$0xff]
    %v146 = vld [vmem:[#allocation2 + $0x378] sm:$0xff]
    %v147 = vld [vmem:[#allocation2 + $0x380] sm:$0xff]
    %v148 = vld [vmem:[#allocation2 + $0x388] sm:$0xff]
    %v149 = vld [vmem:[#allocation2 + $0x390] sm:$0xff]
    %v150 = vld [vmem:[#allocation2 + $0x398] sm:$0xff]
    %v151 = vld [vmem:[#allocation2 + $0x3a0] sm:$0xff]
    %v152 = vld [vmem:[#allocation2 + $0x3a8] sm:$0xff]
    %v153 = vld [vmem:[#allocation2 + $0x3b0] sm:$0xff]
    %v154 = vld [vmem:[#allocation2 + $0x3b8] sm:$0xff]
    %v155 = vld [vmem:[#allocation2 + $0x3c0] sm:$0xff]
    %v156 = vld [vmem:[#allocation2 + $0x3c8] sm:$0xff]
    %v157 = vld [vmem:[#allocation2 + $0x3d0] sm:$0xff]
    %v158 = vld [vmem:[#allocation2 + $0x3d8] sm:$0xff]
    %v159 = vld [vmem:[#allocation2 + $0x3e0] sm:$0xff]
    %v160 = vld [vmem:[#allocation2 + $0x3e8] sm:$0xff]
    %v161 = vld [vmem:[#allocation2 + $0x3f0] sm:$0xff]
    %v162 = vld [vmem:[#allocation2 + $0x3f8] sm:$0xff]
    %v163 = vadd.f32 %v35, %v36
    %164 = vadd.xlane.f32.xlu0 %v163
    %v165 = vpop.xlane.xlu0 %164
    %v166 = vadd.f32 %v37, %v38
    %167 = vadd.xlane.f32.xlu0 %v166
    %v168 = vpop.xlane.xlu0 %167
    %v169 = vadd.f32 %v39, %v40
    %170 = vadd.xlane.f32.xlu0 %v169
    %v171 = vpop.xlane.xlu0 %170
    %v172 = vadd.f32 %v41, %v42
    %173 = vadd.xlane.f32.xlu0 %v172
    %v174 = vpop.xlane.xlu0 %173
    %v175 = vadd.f32 %v43, %v44
    %176 = vadd.xlane.f32.xlu0 %v175
    %v177 = vpop.xlane.xlu0 %176
    %v178 = vadd.f32 %v45, %v46
    %179 = vadd.xlane.f32.xlu0 %v178
    %v180 = vpop.xlane.xlu0 %179
    %v181 = vadd.f32 %v47, %v48
    %182 = vadd.xlane.f32.xlu0 %v181
    %v183 = vpop.xlane.xlu0 %182
    %v184 = vadd.f32 %v49, %v50
    %185 = vadd.xlane.f32.xlu0 %v184
    %v186 = vpop.xlane.xlu0 %185
    %v187 = vadd.f32 %v51, %v52
    %188 = vadd.xlane.f32.xlu0 %v187
    %v189 = vpop.xlane.xlu0 %188
    %v190 = vadd.f32 %v53, %v54
    %191 = vadd.xlane.f32.xlu0 %v190
    %v192 = vpop.xlane.xlu0 %191
    %v193 = vadd.f32 %v55, %v56
    %194 = vadd.xlane.f32.xlu0 %v193
    %v195 = vpop.xlane.xlu0 %194
    %v196 = vadd.f32 %v57, %v58
    %197 = vadd.xlane.f32.xlu0 %v196
    %v198 = vpop.xlane.xlu0 %197
    %v199 = vadd.f32 %v59, %v60
    %200 = vadd.xlane.f32.xlu0 %v199
    %v201 = vpop.xlane.xlu0 %200
    %v202 = vadd.f32 %v61, %v62
    %203 = vadd.xlane.f32.xlu0 %v202
    %v204 = vpop.xlane.xlu0 %203
    %v205 = vadd.f32 %v63, %v64
    %206 = vadd.xlane.f32.xlu0 %v205
    %v207 = vpop.xlane.xlu0 %206
    %v208 = vadd.f32 %v65, %v66
    %209 = vadd.xlane.f32.xlu0 %v208
    %v210 = vpop.xlane.xlu0 %209
    %v211 = vadd.f32 %v67, %v68
    %212 = vadd.xlane.f32.xlu0 %v211
    %v213 = vpop.xlane.xlu0 %212
    %v214 = vadd.f32 %v69, %v70
    %215 = vadd.xlane.f32.xlu0 %v214
    %v216 = vpop.xlane.xlu0 %215
    %v217 = vadd.f32 %v71, %v72
    %218 = vadd.xlane.f32.xlu0 %v217
    %v219 = vpop.xlane.xlu0 %218
    %v220 = vadd.f32 %v73, %v74
    %221 = vadd.xlane.f32.xlu0 %v220
    %v222 = vpop.xlane.xlu0 %221
    %v223 = vadd.f32 %v75, %v76
    %224 = vadd.xlane.f32.xlu0 %v223
    %v225 = vpop.xlane.xlu0 %224
    %v226 = vadd.f32 %v77, %v78
    %227 = vadd.xlane.f32.xlu0 %v226
    %v228 = vpop.xlane.xlu0 %227
    %v229 = vadd.f32 %v79, %v80
    %230 = vadd.xlane.f32.xlu0 %v229
    %v231 = vpop.xlane.xlu0 %230
    %v232 = vadd.f32 %v81, %v82
    %233 = vadd.xlane.f32.xlu0 %v232
    %v234 = vpop.xlane.xlu0 %233
    %v235 = vadd.f32 %v83, %v84
    %236 = vadd.xlane.f32.xlu0 %v235
    %v237 = vpop.xlane.xlu0 %236
    %v238 = vadd.f32 %v85, %v86
    %239 = vadd.xlane.f32.xlu0 %v238
    %v240 = vpop.xlane.xlu0 %239
    %v241 = vadd.f32 %v87, %v88
    %242 = vadd.xlane.f32.xlu0 %v241
    %v243 = vpop.xlane.xlu0 %242
    %v244 = vadd.f32 %v89, %v90
    %245 = vadd.xlane.f32.xlu0 %v244
    %v246 = vpop.xlane.xlu0 %245
    %v247 = vadd.f32 %v91, %v92
    %248 = vadd.xlane.f32.xlu0 %v247
    %v249 = vpop.xlane.xlu0 %248
    %v250 = vadd.f32 %v93, %v94
    %251 = vadd.xlane.f32.xlu0 %v250
    %v252 = vpop.xlane.xlu0 %251
    %v253 = vadd.f32 %v95, %v96
    %254 = vadd.xlane.f32.xlu0 %v253
    %v255 = vpop.xlane.xlu0 %254
    %v256 = vadd.f32 %v97, %v98
    %257 = vadd.xlane.f32.xlu0 %v256
    %v258 = vpop.xlane.xlu0 %257
    %v259 = vadd.f32 %v99, %v100
    %260 = vadd.xlane.f32.xlu0 %v259
    %v261 = vpop.xlane.xlu0 %260
    %v262 = vadd.f32 %v101, %v102
    %263 = vadd.xlane.f32.xlu0 %v262
    %v264 = vpop.xlane.xlu0 %263
    %v265 = vadd.f32 %v103, %v104
    %266 = vadd.xlane.f32.xlu0 %v265
    %v267 = vpop.xlane.xlu0 %266
    %v268 = vadd.f32 %v105, %v106
    %269 = vadd.xlane.f32.xlu0 %v268
    %v270 = vpop.xlane.xlu0 %269
    %v271 = vadd.f32 %v107, %v108
    %272 = vadd.xlane.f32.xlu0 %v271
    %v273 = vpop.xlane.xlu0 %272
    %v274 = vadd.f32 %v109, %v110
    %275 = vadd.xlane.f32.xlu0 %v274
    %v276 = vpop.xlane.xlu0 %275
    %v277 = vadd.f32 %v111, %v112
    %278 = vadd.xlane.f32.xlu0 %v277
    %v279 = vpop.xlane.xlu0 %278
    %v280 = vadd.f32 %v113, %v114
    %281 = vadd.xlane.f32.xlu0 %v280
    %v282 = vpop.xlane.xlu0 %281
    %v283 = vadd.f32 %v115, %v116
    %284 = vadd.xlane.f32.xlu0 %v283
    %v285 = vpop.xlane.xlu0 %284
    %v286 = vadd.f32 %v117, %v118
    %287 = vadd.xlane.f32.xlu0 %v286
    %v288 = vpop.xlane.xlu0 %287
    %v289 = vadd.f32 %v119, %v120
    %290 = vadd.xlane.f32.xlu0 %v289
    %v291 = vpop.xlane.xlu0 %290
    %v292 = vadd.f32 %v121, %v122
    %293 = vadd.xlane.f32.xlu0 %v292
    %v294 = vpop.xlane.xlu0 %293
    %v295 = vadd.f32 %v123, %v124
    %296 = vadd.xlane.f32.xlu0 %v295
    %v297 = vpop.xlane.xlu0 %296
    %v298 = vadd.f32 %v125, %v126
    %299 = vadd.xlane.f32.xlu0 %v298
    %v300 = vpop.xlane.xlu0 %299
    %v301 = vadd.f32 %v127, %v128
    %302 = vadd.xlane.f32.xlu0 %v301
    %v303 = vpop.xlane.xlu0 %302
    %v304 = vadd.f32 %v129, %v130
    %305 = vadd.xlane.f32.xlu0 %v304
    %v306 = vpop.xlane.xlu0 %305
    %v307 = vadd.f32 %v131, %v132
    %308 = vadd.xlane.f32.xlu0 %v307
    %v309 = vpop.xlane.xlu0 %308
    %v310 = vadd.f32 %v133, %v134
    %311 = vadd.xlane.f32.xlu0 %v310
    %v312 = vpop.xlane.xlu0 %311
    %v313 = vadd.f32 %v135, %v136
    %314 = vadd.xlane.f32.xlu0 %v313
    %v315 = vpop.xlane.xlu0 %314
    %v316 = vadd.f32 %v137, %v138
    %317 = vadd.xlane.f32.xlu0 %v316
    %v318 = vpop.xlane.xlu0 %317
    %v319 = vadd.f32 %v139, %v140
    %320 = vadd.xlane.f32.xlu0 %v319
    %v321 = vpop.xlane.xlu0 %320
    %v322 = vadd.f32 %v141, %v142
    %323 = vadd.xlane.f32.xlu0 %v322
    %v324 = vpop.xlane.xlu0 %323
    %v325 = vadd.f32 %v143, %v144
    %326 = vadd.xlane.f32.xlu0 %v325
    %v327 = vpop.xlane.xlu0 %326
    %v328 = vadd.f32 %v145, %v146
    %329 = vadd.xlane.f32.xlu0 %v328
    %v330 = vpop.xlane.xlu0 %329
    %v331 = vadd.f32 %v147, %v148
    %332 = vadd.xlane.f32.xlu0 %v331
    %v333 = vpop.xlane.xlu0 %332
    %v334 = vadd.f32 %v149, %v150
    %335 = vadd.xlane.f32.xlu0 %v334
    %v336 = vpop.xlane.xlu0 %335
    %v337 = vadd.f32 %v151, %v152
    %338 = vadd.xlane.f32.xlu0 %v337
    %v339 = vpop.xlane.xlu0 %338
    %v340 = vadd.f32 %v153, %v154
    %341 = vadd.xlane.f32.xlu0 %v340
    %v342 = vpop.xlane.xlu0 %341
    %v343 = vadd.f32 %v155, %v156
    %344 = vadd.xlane.f32.xlu0 %v343
    %v345 = vpop.xlane.xlu0 %344
    %v346 = vadd.f32 %v157, %v158
    %347 = vadd.xlane.f32.xlu0 %v346
    %v348 = vpop.xlane.xlu0 %347
    %v349 = vadd.f32 %v159, %v160
    %350 = vadd.xlane.f32.xlu0 %v349
    %v351 = vpop.xlane.xlu0 %350
    %v352 = vadd.f32 %v161, %v162
    %353 = vadd.xlane.f32.xlu0 %v352
    %v354 = vpop.xlane.xlu0 %353
    %v355 = vrcp.pop 256.0
    %v356 = vmul.f32 %v165, %v355
    %v357 = vmul.f32 %v168, %v355
    %v358 = vmul.f32 %v171, %v355
    %v359 = vmul.f32 %v174, %v355
    %v360 = vmul.f32 %v177, %v355
    %v361 = vmul.f32 %v180, %v355
    %v362 = vmul.f32 %v183, %v355
    %v363 = vmul.f32 %v186, %v355
    %v364 = vmul.f32 %v189, %v355
    %v365 = vmul.f32 %v192, %v355
    %v366 = vmul.f32 %v195, %v355
    %v367 = vmul.f32 %v198, %v355
    %v368 = vmul.f32 %v201, %v355
    %v369 = vmul.f32 %v204, %v355
    %v370 = vmul.f32 %v207, %v355
    %v371 = vmul.f32 %v210, %v355
    %v372 = vmul.f32 %v213, %v355
    %v373 = vmul.f32 %v216, %v355
    %v374 = vmul.f32 %v219, %v355
    %v375 = vmul.f32 %v222, %v355
    %v376 = vmul.f32 %v225, %v355
    %v377 = vmul.f32 %v228, %v355
    %v378 = vmul.f32 %v231, %v355
    %v379 = vmul.f32 %v234, %v355
    %v380 = vmul.f32 %v237, %v355
    %v381 = vmul.f32 %v240, %v355
    %v382 = vmul.f32 %v243, %v355
    %v383 = vmul.f32 %v246, %v355
    %v384 = vmul.f32 %v249, %v355
    %v385 = vmul.f32 %v252, %v355
    %v386 = vmul.f32 %v255, %v355
    %v387 = vmul.f32 %v258, %v355
    %v388 = vmul.f32 %v261, %v355
    %v389 = vmul.f32 %v264, %v355
    %v390 = vmul.f32 %v267, %v355
    %v391 = vmul.f32 %v270, %v355
    %v392 = vmul.f32 %v273, %v355
    %v393 = vmul.f32 %v276, %v355
    %v394 = vmul.f32 %v279, %v355
    %v395 = vmul.f32 %v282, %v355
    %v396 = vmul.f32 %v285, %v355
    %v397 = vmul.f32 %v288, %v355
    %v398 = vmul.f32 %v291, %v355
    %v399 = vmul.f32 %v294, %v355
    %v400 = vmul.f32 %v297, %v355
    %v401 = vmul.f32 %v300, %v355
    %v402 = vmul.f32 %v303, %v355
    %v403 = vmul.f32 %v306, %v355
    %v404 = vmul.f32 %v309, %v355
    %v405 = vmul.f32 %v312, %v355
    %v406 = vmul.f32 %v315, %v355
    %v407 = vmul.f32 %v318, %v355
    %v408 = vmul.f32 %v321, %v355
    %v409 = vmul.f32 %v324, %v355
    %v410 = vmul.f32 %v327, %v355
    %v411 = vmul.f32 %v330, %v355
    %v412 = vmul.f32 %v333, %v355
    %v413 = vmul.f32 %v336, %v355
    %v414 = vmul.f32 %v339, %v355
    %v415 = vmul.f32 %v342, %v355
    %v416 = vmul.f32 %v345, %v355
    %v417 = vmul.f32 %v348, %v355
    %v418 = vmul.f32 %v351, %v355
    %v419 = vmul.f32 %v354, %v355
    %v420 = vld [vmem:[%s1] sm:$0xff]
    %v421 = vld [vmem:[%s1 + $0x8] sm:$0xff]
    %v422 = vld [vmem:[%s1 + $0x10] sm:$0xff]
    %v423 = vld [vmem:[%s1 + $0x18] sm:$0xff]
    %v424 = vld [vmem:[%s1 + $0x20] sm:$0xff]
    %v425 = vld [vmem:[%s1 + $0x28] sm:$0xff]
    %v426 = vld [vmem:[%s1 + $0x30] sm:$0xff]
    %v427 = vld [vmem:[%s1 + $0x38] sm:$0xff]
    %v428 = vld [vmem:[%s1 + $0x40] sm:$0xff]
    %v429 = vld [vmem:[%s1 + $0x48] sm:$0xff]
    %v430 = vld [vmem:[%s1 + $0x50] sm:$0xff]
    %v431 = vld [vmem:[%s1 + $0x58] sm:$0xff]
    %v432 = vld [vmem:[%s1 + $0x60] sm:$0xff]
    %v433 = vld [vmem:[%s1 + $0x68] sm:$0xff]
    %v434 = vld [vmem:[%s1 + $0x70] sm:$0xff]
    %v435 = vld [vmem:[%s1 + $0x78] sm:$0xff]
    %v436 = vld [vmem:[%s2] sm:$0x1]
    %v438 = vlaneseq
    %v439 = vshrl.u32 %v438, 7
    %v440 = vsub.s32 0, %v439
    %v441 = vrot.slane %v436, %v440
    %v507 = vlaneseq
    %v508 = vand.u32 %v507, 127
    %v509 = vlaneseq
    %v510 = vshrl.u32 %v509, 7
    %v511 = vsub.s32 %v508, %v510
    %v512 = vrot.slane %v356, %v511
    %v513 = vadd.s32 %v508, 4294967288
    %v514 = vlaneseq
    %v515 = vshrl.u32 %v514, 7
    %v516 = vsub.s32 %v513, %v515
    %v517 = vrot.slane %v357, %v516
    %vm518 = vcmask 130112
    %v519 = vsel %vm518, %v517, %v512
    %v520 = vadd.s32 %v508, 4294967280
    %v521 = vlaneseq
    %v522 = vshrl.u32 %v521, 7
    %v523 = vsub.s32 %v520, %v522
    %v524 = vrot.slane %v358, %v523
    %vm525 = vcmask 195712
    %v526 = vsel %vm525, %v524, %v519
    %v527 = vadd.s32 %v508, 4294967272
    %v528 = vlaneseq
    %v529 = vshrl.u32 %v528, 7
    %v530 = vsub.s32 %v527, %v529
    %v531 = vrot.slane %v359, %v530
    %vm532 = vcmask 261312
    %v533 = vsel %vm532, %v531, %v526
    %v534 = vadd.s32 %v508, 4294967264
    %v535 = vlaneseq
    %v536 = vshrl.u32 %v535, 7
    %v537 = vsub.s32 %v534, %v536
    %v538 = vrot.slane %v360, %v537
    %vm539 = vcmask 326912
    %v540 = vsel %vm539, %v538, %v533
    %v541 = vadd.s32 %v508, 4294967256
    %v542 = vlaneseq
    %v543 = vshrl.u32 %v542, 7
    %v544 = vsub.s32 %v541, %v543
    %v545 = vrot.slane %v361, %v544
    %vm546 = vcmask 392512
    %v547 = vsel %vm546, %v545, %v540
    %v548 = vadd.s32 %v508, 4294967248
    %v549 = vlaneseq
    %v550 = vshrl.u32 %v549, 7
    %v551 = vsub.s32 %v548, %v550
    %v552 = vrot.slane %v362, %v551
    %vm553 = vcmask 458112
    %v554 = vsel %vm553, %v552, %v547
    %v555 = vadd.s32 %v508, 4294967240
    %v556 = vlaneseq
    %v557 = vshrl.u32 %v556, 7
    %v558 = vsub.s32 %v555, %v557
    %v559 = vrot.slane %v363, %v558
    %vm560 = vcmask 523712
    %v561 = vsel %vm560, %v559, %v554
    %v562 = vadd.s32 %v508, 4294967232
    %v563 = vlaneseq
    %v564 = vshrl.u32 %v563, 7
    %v565 = vsub.s32 %v562, %v564
    %v566 = vrot.slane %v364, %v565
    %vm567 = vcmask 589312
    %v568 = vsel %vm567, %v566, %v561
    %v569 = vadd.s32 %v508, 4294967224
    %v570 = vlaneseq
    %v571 = vshrl.u32 %v570, 7
    %v572 = vsub.s32 %v569, %v571
    %v573 = vrot.slane %v365, %v572
    %vm574 = vcmask 654912
    %v575 = vsel %vm574, %v573, %v568
    %v576 = vadd.s32 %v508, 4294967216
    %v577 = vlaneseq
    %v578 = vshrl.u32 %v577, 7
    %v579 = vsub.s32 %v576, %v578
    %v580 = vrot.slane %v366, %v579
    %vm581 = vcmask 720512
    %v582 = vsel %vm581, %v580, %v575
    %v583 = vadd.s32 %v508, 4294967208
    %v584 = vlaneseq
    %v585 = vshrl.u32 %v584, 7
    %v586 = vsub.s32 %v583, %v585
    %v587 = vrot.slane %v367, %v586
    %vm588 = vcmask 786112
    %v589 = vsel %vm588, %v587, %v582
    %v590 = vadd.s32 %v508, 4294967200
    %v591 = vlaneseq
    %v592 = vshrl.u32 %v591, 7
    %v593 = vsub.s32 %v590, %v592
    %v594 = vrot.slane %v368, %v593
    %vm595 = vcmask 851712
    %v596 = vsel %vm595, %v594, %v589
    %v597 = vadd.s32 %v508, 4294967192
    %v598 = vlaneseq
    %v599 = vshrl.u32 %v598, 7
    %v600 = vsub.s32 %v597, %v599
    %v601 = vrot.slane %v369, %v600
    %vm602 = vcmask 917312
    %v603 = vsel %vm602, %v601, %v596
    %v604 = vadd.s32 %v508, 4294967184
    %v605 = vlaneseq
    %v606 = vshrl.u32 %v605, 7
    %v607 = vsub.s32 %v604, %v606
    %v608 = vrot.slane %v370, %v607
    %vm609 = vcmask 982912
    %v610 = vsel %vm609, %v608, %v603
    %v611 = vadd.s32 %v508, 4294967176
    %v612 = vlaneseq
    %v613 = vshrl.u32 %v612, 7
    %v614 = vsub.s32 %v611, %v613
    %v615 = vrot.slane %v371, %v614
    %vm616 = vcmask 1048512
    %v617 = vsel %vm616, %v615, %v610
    %v618 = vlaneseq
    %v619 = vshrl.u32 %v618, 7
    %v620 = vsub.s32 %v508, %v619
    %v621 = vrot.slane %v372, %v620
    %v622 = vlaneseq
    %v623 = vshrl.u32 %v622, 7
    %v624 = vsub.s32 %v513, %v623
    %v625 = vrot.slane %v373, %v624
    %v626 = vsel %vm518, %v625, %v621
    %v627 = vlaneseq
    %v628 = vshrl.u32 %v627, 7
    %v629 = vsub.s32 %v520, %v628
    %v630 = vrot.slane %v374, %v629
    %v631 = vsel %vm525, %v630, %v626
    %v632 = vlaneseq
    %v633 = vshrl.u32 %v632, 7
    %v634 = vsub.s32 %v527, %v633
    %v635 = vrot.slane %v375, %v634
    %v636 = vsel %vm532, %v635, %v631
    %v637 = vlaneseq
    %v638 = vshrl.u32 %v637, 7
    %v639 = vsub.s32 %v534, %v638
    %v640 = vrot.slane %v376, %v639
    %v641 = vsel %vm539, %v640, %v636
    %v642 = vlaneseq
    %v643 = vshrl.u32 %v642, 7
    %v644 = vsub.s32 %v541, %v643
    %v645 = vrot.slane %v377, %v644
    %v646 = vsel %vm546, %v645, %v641
    %v647 = vlaneseq
    %v648 = vshrl.u32 %v647, 7
    %v649 = vsub.s32 %v548, %v648
    %v650 = vrot.slane %v378, %v649
    %v651 = vsel %vm553, %v650, %v646
    %v652 = vlaneseq
    %v653 = vshrl.u32 %v652, 7
    %v654 = vsub.s32 %v555, %v653
    %v655 = vrot.slane %v379, %v654
    %v656 = vsel %vm560, %v655, %v651
    %v657 = vlaneseq
    %v658 = vshrl.u32 %v657, 7
    %v659 = vsub.s32 %v562, %v658
    %v660 = vrot.slane %v380, %v659
    %v661 = vsel %vm567, %v660, %v656
    %v662 = vlaneseq
    %v663 = vshrl.u32 %v662, 7
    %v664 = vsub.s32 %v569, %v663
    %v665 = vrot.slane %v381, %v664
    %v666 = vsel %vm574, %v665, %v661
    %v667 = vlaneseq
    %v668 = vshrl.u32 %v667, 7
    %v669 = vsub.s32 %v576, %v668
    %v670 = vrot.slane %v382, %v669
    %v671 = vsel %vm581, %v670, %v666
    %v672 = vlaneseq
    %v673 = vshrl.u32 %v672, 7
    %v674 = vsub.s32 %v583, %v673
    %v675 = vrot.slane %v383, %v674
    %v676 = vsel %vm588, %v675, %v671
    %v677 = vlaneseq
    %v678 = vshrl.u32 %v677, 7
    %v679 = vsub.s32 %v590, %v678
    %v680 = vrot.slane %v384, %v679
    %v681 = vsel %vm595, %v680, %v676
    %v682 = vlaneseq
    %v683 = vshrl.u32 %v682, 7
    %v684 = vsub.s32 %v597, %v683
    %v685 = vrot.slane %v385, %v684
    %v686 = vsel %vm602, %v685, %v681
    %v687 = vlaneseq
    %v688 = vshrl.u32 %v687, 7
    %v689 = vsub.s32 %v604, %v688
    %v690 = vrot.slane %v386, %v689
    %v691 = vsel %vm609, %v690, %v686
    %v692 = vlaneseq
    %v693 = vshrl.u32 %v692, 7
    %v694 = vsub.s32 %v611, %v693
    %v695 = vrot.slane %v387, %v694
    %v696 = vsel %vm616, %v695, %v691
    %v697 = vlaneseq
    %v698 = vshrl.u32 %v697, 7
    %v699 = vsub.s32 %v508, %v698
    %v700 = vrot.slane %v388, %v699
    %v701 = vlaneseq
    %v702 = vshrl.u32 %v701, 7
    %v703 = vsub.s32 %v513, %v702
    %v704 = vrot.slane %v389, %v703
    %v705 = vsel %vm518, %v704, %v700
    %v706 = vlaneseq
    %v707 = vshrl.u32 %v706, 7
    %v708 = vsub.s32 %v520, %v707
    %v709 = vrot.slane %v390, %v708
    %v710 = vsel %vm525, %v709, %v705
    %v711 = vlaneseq
    %v712 = vshrl.u32 %v711, 7
    %v713 = vsub.s32 %v527, %v712
    %v714 = vrot.slane %v391, %v713
    %v715 = vsel %vm532, %v714, %v710
    %v716 = vlaneseq
    %v717 = vshrl.u32 %v716, 7
    %v718 = vsub.s32 %v534, %v717
    %v719 = vrot.slane %v392, %v718
    %v720 = vsel %vm539, %v719, %v715
    %v721 = vlaneseq
    %v722 = vshrl.u32 %v721, 7
    %v723 = vsub.s32 %v541, %v722
    %v724 = vrot.slane %v393, %v723
    %v725 = vsel %vm546, %v724, %v720
    %v726 = vlaneseq
    %v727 = vshrl.u32 %v726, 7
    %v728 = vsub.s32 %v548, %v727
    %v729 = vrot.slane %v394, %v728
    %v730 = vsel %vm553, %v729, %v725
    %v731 = vlaneseq
    %v732 = vshrl.u32 %v731, 7
    %v733 = vsub.s32 %v555, %v732
    %v734 = vrot.slane %v395, %v733
    %v735 = vsel %vm560, %v734, %v730
    %v736 = vlaneseq
    %v737 = vshrl.u32 %v736, 7
    %v738 = vsub.s32 %v562, %v737
    %v739 = vrot.slane %v396, %v738
    %v740 = vsel %vm567, %v739, %v735
    %v741 = vlaneseq
    %v742 = vshrl.u32 %v741, 7
    %v743 = vsub.s32 %v569, %v742
    %v744 = vrot.slane %v397, %v743
    %v745 = vsel %vm574, %v744, %v740
    %v746 = vlaneseq
    %v747 = vshrl.u32 %v746, 7
    %v748 = vsub.s32 %v576, %v747
    %v749 = vrot.slane %v398, %v748
    %v750 = vsel %vm581, %v749, %v745
    %v751 = vlaneseq
    %v752 = vshrl.u32 %v751, 7
    %v753 = vsub.s32 %v583, %v752
    %v754 = vrot.slane %v399, %v753
    %v755 = vsel %vm588, %v754, %v750
    %v756 = vlaneseq
    %v757 = vshrl.u32 %v756, 7
    %v758 = vsub.s32 %v590, %v757
    %v759 = vrot.slane %v400, %v758
    %v760 = vsel %vm595, %v759, %v755
    %v761 = vlaneseq
    %v762 = vshrl.u32 %v761, 7
    %v763 = vsub.s32 %v597, %v762
    %v764 = vrot.slane %v401, %v763
    %v765 = vsel %vm602, %v764, %v760
    %v766 = vlaneseq
    %v767 = vshrl.u32 %v766, 7
    %v768 = vsub.s32 %v604, %v767
    %v769 = vrot.slane %v402, %v768
    %v770 = vsel %vm609, %v769, %v765
    %v771 = vlaneseq
    %v772 = vshrl.u32 %v771, 7
    %v773 = vsub.s32 %v611, %v772
    %v774 = vrot.slane %v403, %v773
    %v775 = vsel %vm616, %v774, %v770
    %v776 = vlaneseq
    %v777 = vshrl.u32 %v776, 7
    %v778 = vsub.s32 %v508, %v777
    %v779 = vrot.slane %v404, %v778
    %v780 = vlaneseq
    %v781 = vshrl.u32 %v780, 7
    %v782 = vsub.s32 %v513, %v781
    %v783 = vrot.slane %v405, %v782
    %v784 = vsel %vm518, %v783, %v779
    %v785 = vlaneseq
    %v786 = vshrl.u32 %v785, 7
    %v787 = vsub.s32 %v520, %v786
    %v788 = vrot.slane %v406, %v787
    %v789 = vsel %vm525, %v788, %v784
    %v790 = vlaneseq
    %v791 = vshrl.u32 %v790, 7
    %v792 = vsub.s32 %v527, %v791
    %v793 = vrot.slane %v407, %v792
    %v794 = vsel %vm532, %v793, %v789
    %v795 = vlaneseq
    %v796 = vshrl.u32 %v795, 7
    %v797 = vsub.s32 %v534, %v796
    %v798 = vrot.slane %v408, %v797
    %v799 = vsel %vm539, %v798, %v794
    %v800 = vlaneseq
    %v801 = vshrl.u32 %v800, 7
    %v802 = vsub.s32 %v541, %v801
    %v803 = vrot.slane %v409, %v802
    %v804 = vsel %vm546, %v803, %v799
    %v805 = vlaneseq
    %v806 = vshrl.u32 %v805, 7
    %v807 = vsub.s32 %v548, %v806
    %v808 = vrot.slane %v410, %v807
    %v809 = vsel %vm553, %v808, %v804
    %v810 = vlaneseq
    %v811 = vshrl.u32 %v810, 7
    %v812 = vsub.s32 %v555, %v811
    %v813 = vrot.slane %v411, %v812
    %v814 = vsel %vm560, %v813, %v809
    %v815 = vlaneseq
    %v816 = vshrl.u32 %v815, 7
    %v817 = vsub.s32 %v562, %v816
    %v818 = vrot.slane %v412, %v817
    %v819 = vsel %vm567, %v818, %v814
    %v820 = vlaneseq
    %v821 = vshrl.u32 %v820, 7
    %v822 = vsub.s32 %v569, %v821
    %v823 = vrot.slane %v413, %v822
    %v824 = vsel %vm574, %v823, %v819
    %v825 = vlaneseq
    %v826 = vshrl.u32 %v825, 7
    %v827 = vsub.s32 %v576, %v826
    %v828 = vrot.slane %v414, %v827
    %v829 = vsel %vm581, %v828, %v824
    %v830 = vlaneseq
    %v831 = vshrl.u32 %v830, 7
    %v832 = vsub.s32 %v583, %v831
    %v833 = vrot.slane %v415, %v832
    %v834 = vsel %vm588, %v833, %v829
    %v835 = vlaneseq
    %v836 = vshrl.u32 %v835, 7
    %v837 = vsub.s32 %v590, %v836
    %v838 = vrot.slane %v416, %v837
    %v839 = vsel %vm595, %v838, %v834
    %v840 = vlaneseq
    %v841 = vshrl.u32 %v840, 7
    %v842 = vsub.s32 %v597, %v841
    %v843 = vrot.slane %v417, %v842
    %v844 = vsel %vm602, %v843, %v839
    %v845 = vlaneseq
    %v846 = vshrl.u32 %v845, 7
    %v847 = vsub.s32 %v604, %v846
    %v848 = vrot.slane %v418, %v847
    %v849 = vsel %vm609, %v848, %v844
    %v850 = vlaneseq
    %v851 = vshrl.u32 %v850, 7
    %v852 = vsub.s32 %v611, %v851
    %v853 = vrot.slane %v419, %v852
    %v854 = vsel %vm616, %v853, %v849
    %vm855 = vcmask 1041409
    %v856 = vsel %vm855, %v696, %v617
    %vm857 = vcmask 1042434
    %v858 = vsel %vm857, %v775, %v856
    %vm859 = vcmask 1043459
    %v860 = vsel %vm859, %v854, %v858
    %862 = vmatprep.subr.mxu0 0.0
    %863 = vmatpush1.msra.mxu0 %v435
    %864 = vmatprep.subr.mxu0 0.0
    %865 = vmatpush1.msra.mxu0 %v434
    %866 = vmatprep.subr.mxu0 0.0
    %867 = vmatpush1.msra.mxu0 %v433
    %868 = vmatprep.subr.mxu0 0.0
    %869 = vmatpush1.msra.mxu0 %v432
    %870 = vmatprep.subr.mxu0 0.0
    %871 = vmatpush1.msra.mxu0 %v431
    %872 = vmatprep.subr.mxu0 0.0
    %873 = vmatpush1.msra.mxu0 %v430
    %874 = vmatprep.subr.mxu0 0.0
    %875 = vmatpush1.msra.mxu0 %v429
    %876 = vmatprep.subr.mxu0 0.0
    %877 = vmatpush1.msra.mxu0 %v428
    %878 = vmatprep.subr.mxu0 0.0
    %879 = vmatpush1.msra.mxu0 %v427
    %880 = vmatprep.subr.mxu0 0.0
    %881 = vmatpush1.msra.mxu0 %v426
    %882 = vmatprep.subr.mxu0 0.0
    %883 = vmatpush1.msra.mxu0 %v425
    %884 = vmatprep.subr.mxu0 0.0
    %885 = vmatpush1.msra.mxu0 %v424
    %886 = vmatprep.subr.mxu0 0.0
    %887 = vmatpush1.msra.mxu0 %v423
    %888 = vmatprep.subr.mxu0 0.0
    %889 = vmatpush1.msra.mxu0 %v422
    %890 = vmatprep.subr.mxu0 0.0
    %891 = vmatpush1.msra.mxu0 %v421
    %892 = vmatprep.subr.mxu0 0.0
    %893 = vmatpush1.msra.mxu0 %v420
    %894 = vmatprep.subr.mxu0 0.0
    %895 = vmatpush2.msra.mxu0 0.0
    %896 = vmatprep.subr.mxu0 0.0
    %897 = vmatpush2.msra.mxu0 0.0
    %898 = vmatprep.subr.mxu0 0.0
    %899 = vmatpush2.msra.mxu0 0.0
    %900 = vmatprep.subr.mxu0 0.0
    %901 = vmatpush2.msra.mxu0 0.0
    %902 = vmatprep.subr.mxu0 0.0
    %903 = vmatpush2.msra.mxu0 0.0
    %904 = vmatprep.subr.mxu0 0.0
    %905 = vmatpush2.msra.mxu0 0.0
    %906 = vmatprep.subr.mxu0 0.0
    %907 = vmatpush2.msra.mxu0 0.0
    %908 = vmatprep.subr.mxu0 0.0
    %909 = vmatpush2.msra.mxu0 0.0
    %910 = vmatprep.subr.mxu0 0.0
    %911 = vmatpush2.msra.mxu0 0.0
    %912 = vmatprep.subr.mxu0 0.0
    %913 = vmatpush2.msra.mxu0 0.0
    %914 = vmatprep.subr.mxu0 0.0
    %915 = vmatpush2.msra.mxu0 0.0
    %916 = vmatprep.subr.mxu0 0.0
    %917 = vmatpush2.msra.mxu0 0.0
    %918 = vmatprep.subr.mxu0 0.0
    %919 = vmatpush2.msra.mxu0 0.0
    %920 = vmatprep.subr.mxu0 0.0
    %921 = vmatpush2.msra.mxu0 0.0
    %922 = vmatprep.subr.mxu0 0.0
    %923 = vmatpush2.msra.mxu0 0.0
    %924 = vmatprep.subr.mxu0 0.0
    %925 = vmatpush2.msra.mxu0 0.0
    %926 = vmatprep.mubr.f32.mxu0 0.0
    %927 = vmatmul.mubr.f32.gmra.mxu0 %v860
    %v928 = vpop.f32.mrf.mxu0
    %v929 = vadd.f32 %v441, %v928
    %v930 = vpop.f32.mrf.mxu0
    %931 = vdwg.mxu0
    %v932 = vxor.u32 %v929, 2147483648
    %v933 = vmul.f32 %v932, 1.442695
    %v934 = vpow.pop %v933
    %v935 = vadd.f32 %v934, 1.0
    %v936 = vrcp.pop %v935
    %v937 = vmul.f32 1.0, %v936
    %v938 = vld [vmem:[%s3] sm:$0xff]
    %v939 = vld [vmem:[%s4] sm:$0x1]
    %v941 = vlaneseq
    %v942 = vshrl.u32 %v941, 7
    %v943 = vsub.s32 0, %v942
    %v944 = vrot.slane %v939, %v943
    %vm946 = vcmask 64512
    %v948 = vsel %vm946, %v937, 0
    %950 = vmatprep.subr.mxu0 0.0
    %951 = vmatpush1.msra.mxu0 0.0
    %952 = vmatprep.subr.mxu0 0.0
    %953 = vmatpush1.msra.mxu0 0.0
    %954 = vmatprep.subr.mxu0 0.0
    %955 = vmatpush1.msra.mxu0 0.0
    %956 = vmatprep.subr.mxu0 0.0
    %957 = vmatpush1.msra.mxu0 0.0
    %958 = vmatprep.subr.mxu0 0.0
    %959 = vmatpush1.msra.mxu0 0.0
    %960 = vmatprep.subr.mxu0 0.0
    %961 = vmatpush1.msra.mxu0 0.0
    %962 = vmatprep.subr.mxu0 0.0
    %963 = vmatpush1.msra.mxu0 0.0
    %964 = vmatprep.subr.mxu0 0.0
    %965 = vmatpush1.msra.mxu0 0.0
    %966 = vmatprep.subr.mxu0 0.0
    %967 = vmatpush1.msra.mxu0 0.0
    %968 = vmatprep.subr.mxu0 0.0
    %969 = vmatpush1.msra.mxu0 0.0
    %970 = vmatprep.subr.mxu0 0.0
    %971 = vmatpush1.msra.mxu0 0.0
    %972 = vmatprep.subr.mxu0 0.0
    %973 = vmatpush1.msra.mxu0 0.0
    %974 = vmatprep.subr.mxu0 0.0
    %975 = vmatpush1.msra.mxu0 0.0
    %976 = vmatprep.subr.mxu0 0.0
    %977 = vmatpush1.msra.mxu0 0.0
    %978 = vmatprep.subr.mxu0 0.0
    %979 = vmatpush1.msra.mxu0 0.0
    %980 = vmatprep.subr.mxu0 0.0
    %981 = vmatpush1.msra.mxu0 %v938
    %982 = vmatprep.subr.mxu0 0.0
    %983 = vmatpush2.msra.mxu0 0.0
    %984 = vmatprep.subr.mxu0 0.0
    %985 = vmatpush2.msra.mxu0 0.0
    %986 = vmatprep.subr.mxu0 0.0
    %987 = vmatpush2.msra.mxu0 0.0
    %988 = vmatprep.subr.mxu0 0.0
    %989 = vmatpush2.msra.mxu0 0.0
    %990 = vmatprep.subr.mxu0 0.0
    %991 = vmatpush2.msra.mxu0 0.0
    %992 = vmatprep.subr.mxu0 0.0
    %993 = vmatpush2.msra.mxu0 0.0
    %994 = vmatprep.subr.mxu0 0.0
    %995 = vmatpush2.msra.mxu0 0.0
    %996 = vmatprep.subr.mxu0 0.0
    %997 = vmatpush2.msra.mxu0 0.0
    %998 = vmatprep.subr.mxu0 0.0
    %999 = vmatpush2.msra.mxu0 0.0
    %1000 = vmatprep.subr.mxu0 0.0
    %1001 = vmatpush2.msra.mxu0 0.0
    %1002 = vmatprep.subr.mxu0 0.0
    %1003 = vmatpush2.msra.mxu0 0.0
    %1004 = vmatprep.subr.mxu0 0.0
    %1005 = vmatpush2.msra.mxu0 0.0
    %1006 = vmatprep.subr.mxu0 0.0
    %1007 = vmatpush2.msra.mxu0 0.0
    %1008 = vmatprep.subr.mxu0 0.0
    %1009 = vmatpush2.msra.mxu0 0.0
    %1010 = vmatprep.subr.mxu0 0.0
    %1011 = vmatpush2.msra.mxu0 0.0
    %1012 = vmatprep.subr.mxu0 0.0
    %1013 = vmatpush2.msra.mxu0 0.0
    %1014 = vmatprep.mubr.f32.mxu0 0.0
    %1015 = vmatmul.mubr.f32.gmra.mxu0 %v948
    %v1016 = vpop.f32.mrf.mxu0
    %v1017 = vadd.f32 %v944, %v1016
    %v1018 = vpop.f32.mrf.mxu0
    %1019 = vdwg.mxu0
    %v1020 = vxor.u32 %v1017, 2147483648
    %v1021 = vmul.f32 %v1020, 1.442695
    %v1022 = vpow.pop %v1021
    %v1023 = vadd.f32 %v1022, 1.0
    %v1024 = vrcp.pop %v1023
    %v1025 = vmul.f32 1.0, %v1024
    %v1026 = vlaneseq
    %v1027 = vshrl.u32 %v1026, 7
    %v1028 = vsub.s32 0, %v1027
    %v1029 = vrot.slane %v1025, %v1028
    %1031 = vbcast.lane.b32.xlu0 %v1029, 256
    %v1032 = vpop.permute.xlu0 %1031
    %s1034 = sor.u32 256, 8
    %1035 = vbcast.lane.b32.xlu0 %v1029, %s1034
    %v1036 = vpop.permute.xlu0 %1035
    %s1038 = sor.u32 256, 16
    %1039 = vbcast.lane.b32.xlu0 %v1029, %s1038
    %v1040 = vpop.permute.xlu0 %1039
    %s1042 = sor.u32 256, 24
    %1043 = vbcast.lane.b32.xlu0 %v1029, %s1042
    %v1044 = vpop.permute.xlu0 %1043
    %s1046 = sor.u32 256, 32
    %1047 = vbcast.lane.b32.xlu0 %v1029, %s1046
    %v1048 = vpop.permute.xlu0 %1047
    %s1050 = sor.u32 256, 40
    %1051 = vbcast.lane.b32.xlu0 %v1029, %s1050
    %v1052 = vpop.permute.xlu0 %1051
    %s1054 = sor.u32 256, 48
    %1055 = vbcast.lane.b32.xlu0 %v1029, %s1054
    %v1056 = vpop.permute.xlu0 %1055
    %s1058 = sor.u32 256, 56
    %1059 = vbcast.lane.b32.xlu0 %v1029, %s1058
    %v1060 = vpop.permute.xlu0 %1059
    %s1062 = sor.u32 256, 64
    %1063 = vbcast.lane.b32.xlu0 %v1029, %s1062
    %v1064 = vpop.permute.xlu0 %1063
    %s1066 = sor.u32 256, 72
    %1067 = vbcast.lane.b32.xlu0 %v1029, %s1066
    %v1068 = vpop.permute.xlu0 %1067
    %s1070 = sor.u32 256, 80
    %1071 = vbcast.lane.b32.xlu0 %v1029, %s1070
    %v1072 = vpop.permute.xlu0 %1071
    %s1074 = sor.u32 256, 88
    %1075 = vbcast.lane.b32.xlu0 %v1029, %s1074
    %v1076 = vpop.permute.xlu0 %1075
    %s1078 = sor.u32 256, 96
    %1079 = vbcast.lane.b32.xlu0 %v1029, %s1078
    %v1080 = vpop.permute.xlu0 %1079
    %s1082 = sor.u32 256, 104
    %1083 = vbcast.lane.b32.xlu0 %v1029, %s1082
    %v1084 = vpop.permute.xlu0 %1083
    %s1086 = sor.u32 256, 112
    %1087 = vbcast.lane.b32.xlu0 %v1029, %s1086
    %v1088 = vpop.permute.xlu0 %1087
    %s1090 = sor.u32 256, 120
    %1091 = vbcast.lane.b32.xlu0 %v1029, %s1090
    %v1092 = vpop.permute.xlu0 %1091
    %v1093 = vlaneseq
    %v1094 = vshrl.u32 %v1093, 7
    %v1095 = vsub.s32 1, %v1094
    %v1096 = vrot.slane %v1025, %v1095
    %1098 = vbcast.lane.b32.xlu0 %v1096, 256
    %v1099 = vpop.permute.xlu0 %1098
    %s1101 = sor.u32 256, 8
    %1102 = vbcast.lane.b32.xlu0 %v1096, %s1101
    %v1103 = vpop.permute.xlu0 %1102
    %s1105 = sor.u32 256, 16
    %1106 = vbcast.lane.b32.xlu0 %v1096, %s1105
    %v1107 = vpop.permute.xlu0 %1106
    %s1109 = sor.u32 256, 24
    %1110 = vbcast.lane.b32.xlu0 %v1096, %s1109
    %v1111 = vpop.permute.xlu0 %1110
    %s1113 = sor.u32 256, 32
    %1114 = vbcast.lane.b32.xlu0 %v1096, %s1113
    %v1115 = vpop.permute.xlu0 %1114
    %s1117 = sor.u32 256, 40
    %1118 = vbcast.lane.b32.xlu0 %v1096, %s1117
    %v1119 = vpop.permute.xlu0 %1118
    %s1121 = sor.u32 256, 48
    %1122 = vbcast.lane.b32.xlu0 %v1096, %s1121
    %v1123 = vpop.permute.xlu0 %1122
    %s1125 = sor.u32 256, 56
    %1126 = vbcast.lane.b32.xlu0 %v1096, %s1125
    %v1127 = vpop.permute.xlu0 %1126
    %s1129 = sor.u32 256, 64
    %1130 = vbcast.lane.b32.xlu0 %v1096, %s1129
    %v1131 = vpop.permute.xlu0 %1130
    %s1133 = sor.u32 256, 72
    %1134 = vbcast.lane.b32.xlu0 %v1096, %s1133
    %v1135 = vpop.permute.xlu0 %1134
    %s1137 = sor.u32 256, 80
    %1138 = vbcast.lane.b32.xlu0 %v1096, %s1137
    %v1139 = vpop.permute.xlu0 %1138
    %s1141 = sor.u32 256, 88
    %1142 = vbcast.lane.b32.xlu0 %v1096, %s1141
    %v1143 = vpop.permute.xlu0 %1142
    %s1145 = sor.u32 256, 96
    %1146 = vbcast.lane.b32.xlu0 %v1096, %s1145
    %v1147 = vpop.permute.xlu0 %1146
    %s1149 = sor.u32 256, 104
    %1150 = vbcast.lane.b32.xlu0 %v1096, %s1149
    %v1151 = vpop.permute.xlu0 %1150
    %s1153 = sor.u32 256, 112
    %1154 = vbcast.lane.b32.xlu0 %v1096, %s1153
    %v1155 = vpop.permute.xlu0 %1154
    %s1157 = sor.u32 256, 120
    %1158 = vbcast.lane.b32.xlu0 %v1096, %s1157
    %v1159 = vpop.permute.xlu0 %1158
    %v1160 = vlaneseq
    %v1161 = vshrl.u32 %v1160, 7
    %v1162 = vsub.s32 2, %v1161
    %v1163 = vrot.slane %v1025, %v1162
    %1165 = vbcast.lane.b32.xlu0 %v1163, 256
    %v1166 = vpop.permute.xlu0 %1165
    %s1168 = sor.u32 256, 8
    %1169 = vbcast.lane.b32.xlu0 %v1163, %s1168
    %v1170 = vpop.permute.xlu0 %1169
    %s1172 = sor.u32 256, 16
    %1173 = vbcast.lane.b32.xlu0 %v1163, %s1172
    %v1174 = vpop.permute.xlu0 %1173
    %s1176 = sor.u32 256, 24
    %1177 = vbcast.lane.b32.xlu0 %v1163, %s1176
    %v1178 = vpop.permute.xlu0 %1177
    %s1180 = sor.u32 256, 32
    %1181 = vbcast.lane.b32.xlu0 %v1163, %s1180
    %v1182 = vpop.permute.xlu0 %1181
    %s1184 = sor.u32 256, 40
    %1185 = vbcast.lane.b32.xlu0 %v1163, %s1184
    %v1186 = vpop.permute.xlu0 %1185
    %s1188 = sor.u32 256, 48
    %1189 = vbcast.lane.b32.xlu0 %v1163, %s1188
    %v1190 = vpop.permute.xlu0 %1189
    %s1192 = sor.u32 256, 56
    %1193 = vbcast.lane.b32.xlu0 %v1163, %s1192
    %v1194 = vpop.permute.xlu0 %1193
    %s1196 = sor.u32 256, 64
    %1197 = vbcast.lane.b32.xlu0 %v1163, %s1196
    %v1198 = vpop.permute.xlu0 %1197
    %s1200 = sor.u32 256, 72
    %1201 = vbcast.lane.b32.xlu0 %v1163, %s1200
    %v1202 = vpop.permute.xlu0 %1201
    %s1204 = sor.u32 256, 80
    %1205 = vbcast.lane.b32.xlu0 %v1163, %s1204
    %v1206 = vpop.permute.xlu0 %1205
    %s1208 = sor.u32 256, 88
    %1209 = vbcast.lane.b32.xlu0 %v1163, %s1208
    %v1210 = vpop.permute.xlu0 %1209
    %s1212 = sor.u32 256, 96
    %1213 = vbcast.lane.b32.xlu0 %v1163, %s1212
    %v1214 = vpop.permute.xlu0 %1213
    %s1216 = sor.u32 256, 104
    %1217 = vbcast.lane.b32.xlu0 %v1163, %s1216
    %v1218 = vpop.permute.xlu0 %1217
    %s1220 = sor.u32 256, 112
    %1221 = vbcast.lane.b32.xlu0 %v1163, %s1220
    %v1222 = vpop.permute.xlu0 %1221
    %s1224 = sor.u32 256, 120
    %1225 = vbcast.lane.b32.xlu0 %v1163, %s1224
    %v1226 = vpop.permute.xlu0 %1225
    %v1227 = vlaneseq
    %v1228 = vshrl.u32 %v1227, 7
    %v1229 = vsub.s32 3, %v1228
    %v1230 = vrot.slane %v1025, %v1229
    %1232 = vbcast.lane.b32.xlu0 %v1230, 256
    %v1233 = vpop.permute.xlu0 %1232
    %s1235 = sor.u32 256, 8
    %1236 = vbcast.lane.b32.xlu0 %v1230, %s1235
    %v1237 = vpop.permute.xlu0 %1236
    %s1239 = sor.u32 256, 16
    %1240 = vbcast.lane.b32.xlu0 %v1230, %s1239
    %v1241 = vpop.permute.xlu0 %1240
    %s1243 = sor.u32 256, 24
    %1244 = vbcast.lane.b32.xlu0 %v1230, %s1243
    %v1245 = vpop.permute.xlu0 %1244
    %s1247 = sor.u32 256, 32
    %1248 = vbcast.lane.b32.xlu0 %v1230, %s1247
    %v1249 = vpop.permute.xlu0 %1248
    %s1251 = sor.u32 256, 40
    %1252 = vbcast.lane.b32.xlu0 %v1230, %s1251
    %v1253 = vpop.permute.xlu0 %1252
    %s1255 = sor.u32 256, 48
    %1256 = vbcast.lane.b32.xlu0 %v1230, %s1255
    %v1257 = vpop.permute.xlu0 %1256
    %s1259 = sor.u32 256, 56
    %1260 = vbcast.lane.b32.xlu0 %v1230, %s1259
    %v1261 = vpop.permute.xlu0 %1260
    %s1263 = sor.u32 256, 64
    %1264 = vbcast.lane.b32.xlu0 %v1230, %s1263
    %v1265 = vpop.permute.xlu0 %1264
    %s1267 = sor.u32 256, 72
    %1268 = vbcast.lane.b32.xlu0 %v1230, %s1267
    %v1269 = vpop.permute.xlu0 %1268
    %s1271 = sor.u32 256, 80
    %1272 = vbcast.lane.b32.xlu0 %v1230, %s1271
    %v1273 = vpop.permute.xlu0 %1272
    %s1275 = sor.u32 256, 88
    %1276 = vbcast.lane.b32.xlu0 %v1230, %s1275
    %v1277 = vpop.permute.xlu0 %1276
    %s1279 = sor.u32 256, 96
    %1280 = vbcast.lane.b32.xlu0 %v1230, %s1279
    %v1281 = vpop.permute.xlu0 %1280
    %s1283 = sor.u32 256, 104
    %1284 = vbcast.lane.b32.xlu0 %v1230, %s1283
    %v1285 = vpop.permute.xlu0 %1284
    %s1287 = sor.u32 256, 112
    %1288 = vbcast.lane.b32.xlu0 %v1230, %s1287
    %v1289 = vpop.permute.xlu0 %1288
    %s1291 = sor.u32 256, 120
    %1292 = vbcast.lane.b32.xlu0 %v1230, %s1291
    %v1293 = vpop.permute.xlu0 %1292
    %v1294 = vmul.f32 %v35, %v1032
    %v1295 = vmul.f32 %v36, %v1032
    %v1296 = vmul.f32 %v37, %v1036
    %v1297 = vmul.f32 %v38, %v1036
    %v1298 = vmul.f32 %v39, %v1040
    %v1299 = vmul.f32 %v40, %v1040
    %v1300 = vmul.f32 %v41, %v1044
    %v1301 = vmul.f32 %v42, %v1044
    %v1302 = vmul.f32 %v43, %v1048
    %v1303 = vmul.f32 %v44, %v1048
    %v1304 = vmul.f32 %v45, %v1052
    %v1305 = vmul.f32 %v46, %v1052
    %v1306 = vmul.f32 %v47, %v1056
    %v1307 = vmul.f32 %v48, %v1056
    %v1308 = vmul.f32 %v49, %v1060
    %v1309 = vmul.f32 %v50, %v1060
    %v1310 = vmul.f32 %v51, %v1064
    %v1311 = vmul.f32 %v52, %v1064
    %v1312 = vmul.f32 %v53, %v1068
    %v1313 = vmul.f32 %v54, %v1068
    %v1314 = vmul.f32 %v55, %v1072
    %v1315 = vmul.f32 %v56, %v1072
    %v1316 = vmul.f32 %v57, %v1076
    %v1317 = vmul.f32 %v58, %v1076
    %v1318 = vmul.f32 %v59, %v1080
    %v1319 = vmul.f32 %v60, %v1080
    %v1320 = vmul.f32 %v61, %v1084
    %v1321 = vmul.f32 %v62, %v1084
    %v1322 = vmul.f32 %v63, %v1088
    %v1323 = vmul.f32 %v64, %v1088
    %v1324 = vmul.f32 %v65, %v1092
    %v1325 = vmul.f32 %v66, %v1092
    %v1326 = vmul.f32 %v67, %v1099
    %v1327 = vmul.f32 %v68, %v1099
    %v1328 = vmul.f32 %v69, %v1103
    %v1329 = vmul.f32 %v70, %v1103
    %v1330 = vmul.f32 %v71, %v1107
    %v1331 = vmul.f32 %v72, %v1107
    %v1332 = vmul.f32 %v73, %v1111
    %v1333 = vmul.f32 %v74, %v1111
    %v1334 = vmul.f32 %v75, %v1115
    %v1335 = vmul.f32 %v76, %v1115
    %v1336 = vmul.f32 %v77, %v1119
    %v1337 = vmul.f32 %v78, %v1119
    %v1338 = vmul.f32 %v79, %v1123
    %v1339 = vmul.f32 %v80, %v1123
    %v1340 = vmul.f32 %v81, %v1127
    %v1341 = vmul.f32 %v82, %v1127
    %v1342 = vmul.f32 %v83, %v1131
    %v1343 = vmul.f32 %v84, %v1131
    %v1344 = vmul.f32 %v85, %v1135
    %v1345 = vmul.f32 %v86, %v1135
    %v1346 = vmul.f32 %v87, %v1139
    %v1347 = vmul.f32 %v88, %v1139
    %v1348 = vmul.f32 %v89, %v1143
    %v1349 = vmul.f32 %v90, %v1143
    %v1350 = vmul.f32 %v91, %v1147
    %v1351 = vmul.f32 %v92, %v1147
    %v1352 = vmul.f32 %v93, %v1151
    %v1353 = vmul.f32 %v94, %v1151
    %v1354 = vmul.f32 %v95, %v1155
    %v1355 = vmul.f32 %v96, %v1155
    %v1356 = vmul.f32 %v97, %v1159
    %v1357 = vmul.f32 %v98, %v1159
    %v1358 = vmul.f32 %v99, %v1166
    %v1359 = vmul.f32 %v100, %v1166
    %v1360 = vmul.f32 %v101, %v1170
    %v1361 = vmul.f32 %v102, %v1170
    %v1362 = vmul.f32 %v103, %v1174
    %v1363 = vmul.f32 %v104, %v1174
    %v1364 = vmul.f32 %v105, %v1178
    %v1365 = vmul.f32 %v106, %v1178
    %v1366 = vmul.f32 %v107, %v1182
    %v1367 = vmul.f32 %v108, %v1182
    %v1368 = vmul.f32 %v109, %v1186
    %v1369 = vmul.f32 %v110, %v1186
    %v1370 = vmul.f32 %v111, %v1190
    %v1371 = vmul.f32 %v112, %v1190
    %v1372 = vmul.f32 %v113, %v1194
    %v1373 = vmul.f32 %v114, %v1194
    %v1374 = vmul.f32 %v115, %v1198
    %v1375 = vmul.f32 %v116, %v1198
    %v1376 = vmul.f32 %v117, %v1202
    %v1377 = vmul.f32 %v118, %v1202
    %v1378 = vmul.f32 %v119, %v1206
    %v1379 = vmul.f32 %v120, %v1206
    %v1380 = vmul.f32 %v121, %v1210
    %v1381 = vmul.f32 %v122, %v1210
    %v1382 = vmul.f32 %v123, %v1214
    %v1383 = vmul.f32 %v124, %v1214
    %v1384 = vmul.f32 %v125, %v1218
    %v1385 = vmul.f32 %v126, %v1218
    %v1386 = vmul.f32 %v127, %v1222
    %v1387 = vmul.f32 %v128, %v1222
    %v1388 = vmul.f32 %v129, %v1226
    %v1389 = vmul.f32 %v130, %v1226
    %v1390 = vmul.f32 %v131, %v1233
    %v1391 = vmul.f32 %v132, %v1233
    %v1392 = vmul.f32 %v133, %v1237
    %v1393 = vmul.f32 %v134, %v1237
    %v1394 = vmul.f32 %v135, %v1241
    %v1395 = vmul.f32 %v136, %v1241
    %v1396 = vmul.f32 %v137, %v1245
    %v1397 = vmul.f32 %v138, %v1245
    %v1398 = vmul.f32 %v139, %v1249
    %v1399 = vmul.f32 %v140, %v1249
    %v1400 = vmul.f32 %v141, %v1253
    %v1401 = vmul.f32 %v142, %v1253
    %v1402 = vmul.f32 %v143, %v1257
    %v1403 = vmul.f32 %v144, %v1257
    %v1404 = vmul.f32 %v145, %v1261
    %v1405 = vmul.f32 %v146, %v1261
    %v1406 = vmul.f32 %v147, %v1265
    %v1407 = vmul.f32 %v148, %v1265
    %v1408 = vmul.f32 %v149, %v1269
    %v1409 = vmul.f32 %v150, %v1269
    %v1410 = vmul.f32 %v151, %v1273
    %v1411 = vmul.f32 %v152, %v1273
    %v1412 = vmul.f32 %v153, %v1277
    %v1413 = vmul.f32 %v154, %v1277
    %v1414 = vmul.f32 %v155, %v1281
    %v1415 = vmul.f32 %v156, %v1281
    %v1416 = vmul.f32 %v157, %v1285
    %v1417 = vmul.f32 %v158, %v1285
    %v1418 = vmul.f32 %v159, %v1289
    %v1419 = vmul.f32 %v160, %v1289
    %v1420 = vmul.f32 %v161, %v1293
    %v1421 = vmul.f32 %v162, %v1293
    %1422 = vst [vmem:[#allocation5] sm:$0xff] %v1294
    %1423 = vst [vmem:[#allocation5 + $0x8] sm:$0xff] %v1295
    %1424 = vst [vmem:[#allocation5 + $0x10] sm:$0xff] %v1296
    %1425 = vst [vmem:[#allocation5 + $0x18] sm:$0xff] %v1297
    %1426 = vst [vmem:[#allocation5 + $0x20] sm:$0xff] %v1298
    %1427 = vst [vmem:[#allocation5 + $0x28] sm:$0xff] %v1299
    %1428 = vst [vmem:[#allocation5 + $0x30] sm:$0xff] %v1300
    %1429 = vst [vmem:[#allocation5 + $0x38] sm:$0xff] %v1301
    %1430 = vst [vmem:[#allocation5 + $0x40] sm:$0xff] %v1302
    %1431 = vst [vmem:[#allocation5 + $0x48] sm:$0xff] %v1303
    %1432 = vst [vmem:[#allocation5 + $0x50] sm:$0xff] %v1304
    %1433 = vst [vmem:[#allocation5 + $0x58] sm:$0xff] %v1305
    %1434 = vst [vmem:[#allocation5 + $0x60] sm:$0xff] %v1306
    %1435 = vst [vmem:[#allocation5 + $0x68] sm:$0xff] %v1307
    %1436 = vst [vmem:[#allocation5 + $0x70] sm:$0xff] %v1308
    %1437 = vst [vmem:[#allocation5 + $0x78] sm:$0xff] %v1309
    %1438 = vst [vmem:[#allocation5 + $0x80] sm:$0xff] %v1310
    %1439 = vst [vmem:[#allocation5 + $0x88] sm:$0xff] %v1311
    %1440 = vst [vmem:[#allocation5 + $0x90] sm:$0xff] %v1312
    %1441 = vst [vmem:[#allocation5 + $0x98] sm:$0xff] %v1313
    %1442 = vst [vmem:[#allocation5 + $0xa0] sm:$0xff] %v1314
    %1443 = vst [vmem:[#allocation5 + $0xa8] sm:$0xff] %v1315
    %1444 = vst [vmem:[#allocation5 + $0xb0] sm:$0xff] %v1316
    %1445 = vst [vmem:[#allocation5 + $0xb8] sm:$0xff] %v1317
    %1446 = vst [vmem:[#allocation5 + $0xc0] sm:$0xff] %v1318
    %1447 = vst [vmem:[#allocation5 + $0xc8] sm:$0xff] %v1319
    %1448 = vst [vmem:[#allocation5 + $0xd0] sm:$0xff] %v1320
    %1449 = vst [vmem:[#allocation5 + $0xd8] sm:$0xff] %v1321
    %1450 = vst [vmem:[#allocation5 + $0xe0] sm:$0xff] %v1322
    %1451 = vst [vmem:[#allocation5 + $0xe8] sm:$0xff] %v1323
    %1452 = vst [vmem:[#allocation5 + $0xf0] sm:$0xff] %v1324
    %1453 = vst [vmem:[#allocation5 + $0xf8] sm:$0xff] %v1325
    %1454 = vst [vmem:[#allocation5 + $0x100] sm:$0xff] %v1326
    %1455 = vst [vmem:[#allocation5 + $0x108] sm:$0xff] %v1327
    %1456 = vst [vmem:[#allocation5 + $0x110] sm:$0xff] %v1328
    %1457 = vst [vmem:[#allocation5 + $0x118] sm:$0xff] %v1329
    %1458 = vst [vmem:[#allocation5 + $0x120] sm:$0xff] %v1330
    %1459 = vst [vmem:[#allocation5 + $0x128] sm:$0xff] %v1331
    %1460 = vst [vmem:[#allocation5 + $0x130] sm:$0xff] %v1332
    %1461 = vst [vmem:[#allocation5 + $0x138] sm:$0xff] %v1333
    %1462 = vst [vmem:[#allocation5 + $0x140] sm:$0xff] %v1334
    %1463 = vst [vmem:[#allocation5 + $0x148] sm:$0xff] %v1335
    %1464 = vst [vmem:[#allocation5 + $0x150] sm:$0xff] %v1336
    %1465 = vst [vmem:[#allocation5 + $0x158] sm:$0xff] %v1337
    %1466 = vst [vmem:[#allocation5 + $0x160] sm:$0xff] %v1338
    %1467 = vst [vmem:[#allocation5 + $0x168] sm:$0xff] %v1339
    %1468 = vst [vmem:[#allocation5 + $0x170] sm:$0xff] %v1340
    %1469 = vst [vmem:[#allocation5 + $0x178] sm:$0xff] %v1341
    %1470 = vst [vmem:[#allocation5 + $0x180] sm:$0xff] %v1342
    %1471 = vst [vmem:[#allocation5 + $0x188] sm:$0xff] %v1343
    %1472 = vst [vmem:[#allocation5 + $0x190] sm:$0xff] %v1344
    %1473 = vst [vmem:[#allocation5 + $0x198] sm:$0xff] %v1345
    %1474 = vst [vmem:[#allocation5 + $0x1a0] sm:$0xff] %v1346
    %1475 = vst [vmem:[#allocation5 + $0x1a8] sm:$0xff] %v1347
    %1476 = vst [vmem:[#allocation5 + $0x1b0] sm:$0xff] %v1348
    %1477 = vst [vmem:[#allocation5 + $0x1b8] sm:$0xff] %v1349
    %1478 = vst [vmem:[#allocation5 + $0x1c0] sm:$0xff] %v1350
    %1479 = vst [vmem:[#allocation5 + $0x1c8] sm:$0xff] %v1351
    %1480 = vst [vmem:[#allocation5 + $0x1d0] sm:$0xff] %v1352
    %1481 = vst [vmem:[#allocation5 + $0x1d8] sm:$0xff] %v1353
    %1482 = vst [vmem:[#allocation5 + $0x1e0] sm:$0xff] %v1354
    %1483 = vst [vmem:[#allocation5 + $0x1e8] sm:$0xff] %v1355
    %1484 = vst [vmem:[#allocation5 + $0x1f0] sm:$0xff] %v1356
    %1485 = vst [vmem:[#allocation5 + $0x1f8] sm:$0xff] %v1357
    %1486 = vst [vmem:[#allocation5 + $0x200] sm:$0xff] %v1358
    %1487 = vst [vmem:[#allocation5 + $0x208] sm:$0xff] %v1359
    %1488 = vst [vmem:[#allocation5 + $0x210] sm:$0xff] %v1360
    %1489 = vst [vmem:[#allocation5 + $0x218] sm:$0xff] %v1361
    %1490 = vst [vmem:[#allocation5 + $0x220] sm:$0xff] %v1362
    %1491 = vst [vmem:[#allocation5 + $0x228] sm:$0xff] %v1363
    %1492 = vst [vmem:[#allocation5 + $0x230] sm:$0xff] %v1364
    %1493 = vst [vmem:[#allocation5 + $0x238] sm:$0xff] %v1365
    %1494 = vst [vmem:[#allocation5 + $0x240] sm:$0xff] %v1366
    %1495 = vst [vmem:[#allocation5 + $0x248] sm:$0xff] %v1367
    %1496 = vst [vmem:[#allocation5 + $0x250] sm:$0xff] %v1368
    %1497 = vst [vmem:[#allocation5 + $0x258] sm:$0xff] %v1369
    %1498 = vst [vmem:[#allocation5 + $0x260] sm:$0xff] %v1370
    %1499 = vst [vmem:[#allocation5 + $0x268] sm:$0xff] %v1371
    %1500 = vst [vmem:[#allocation5 + $0x270] sm:$0xff] %v1372
    %1501 = vst [vmem:[#allocation5 + $0x278] sm:$0xff] %v1373
    %1502 = vst [vmem:[#allocation5 + $0x280] sm:$0xff] %v1374
    %1503 = vst [vmem:[#allocation5 + $0x288] sm:$0xff] %v1375
    %1504 = vst [vmem:[#allocation5 + $0x290] sm:$0xff] %v1376
    %1505 = vst [vmem:[#allocation5 + $0x298] sm:$0xff] %v1377
    %1506 = vst [vmem:[#allocation5 + $0x2a0] sm:$0xff] %v1378
    %1507 = vst [vmem:[#allocation5 + $0x2a8] sm:$0xff] %v1379
    %1508 = vst [vmem:[#allocation5 + $0x2b0] sm:$0xff] %v1380
    %1509 = vst [vmem:[#allocation5 + $0x2b8] sm:$0xff] %v1381
    %1510 = vst [vmem:[#allocation5 + $0x2c0] sm:$0xff] %v1382
    %1511 = vst [vmem:[#allocation5 + $0x2c8] sm:$0xff] %v1383
    %1512 = vst [vmem:[#allocation5 + $0x2d0] sm:$0xff] %v1384
    %1513 = vst [vmem:[#allocation5 + $0x2d8] sm:$0xff] %v1385
    %1514 = vst [vmem:[#allocation5 + $0x2e0] sm:$0xff] %v1386
    %1515 = vst [vmem:[#allocation5 + $0x2e8] sm:$0xff] %v1387
    %1516 = vst [vmem:[#allocation5 + $0x2f0] sm:$0xff] %v1388
    %1517 = vst [vmem:[#allocation5 + $0x2f8] sm:$0xff] %v1389
    %1518 = vst [vmem:[#allocation5 + $0x300] sm:$0xff] %v1390
    %1519 = vst [vmem:[#allocation5 + $0x308] sm:$0xff] %v1391
    %1520 = vst [vmem:[#allocation5 + $0x310] sm:$0xff] %v1392
    %1521 = vst [vmem:[#allocation5 + $0x318] sm:$0xff] %v1393
    %1522 = vst [vmem:[#allocation5 + $0x320] sm:$0xff] %v1394
    %1523 = vst [vmem:[#allocation5 + $0x328] sm:$0xff] %v1395
    %1524 = vst [vmem:[#allocation5 + $0x330] sm:$0xff] %v1396
    %1525 = vst [vmem:[#allocation5 + $0x338] sm:$0xff] %v1397
    %1526 = vst [vmem:[#allocation5 + $0x340] sm:$0xff] %v1398
    %1527 = vst [vmem:[#allocation5 + $0x348] sm:$0xff] %v1399
    %1528 = vst [vmem:[#allocation5 + $0x350] sm:$0xff] %v1400
    %1529 = vst [vmem:[#allocation5 + $0x358] sm:$0xff] %v1401
    %1530 = vst [vmem:[#allocation5 + $0x360] sm:$0xff] %v1402
    %1531 = vst [vmem:[#allocation5 + $0x368] sm:$0xff] %v1403
    %1532 = vst [vmem:[#allocation5 + $0x370] sm:$0xff] %v1404
    %1533 = vst [vmem:[#allocation5 + $0x378] sm:$0xff] %v1405
    %1534 = vst [vmem:[#allocation5 + $0x380] sm:$0xff] %v1406
    %1535 = vst [vmem:[#allocation5 + $0x388] sm:$0xff] %v1407
    %1536 = vst [vmem:[#allocation5 + $0x390] sm:$0xff] %v1408
    %1537 = vst [vmem:[#allocation5 + $0x398] sm:$0xff] %v1409
    %1538 = vst [vmem:[#allocation5 + $0x3a0] sm:$0xff] %v1410
    %1539 = vst [vmem:[#allocation5 + $0x3a8] sm:$0xff] %v1411
    %1540 = vst [vmem:[#allocation5 + $0x3b0] sm:$0xff] %v1412
    %1541 = vst [vmem:[#allocation5 + $0x3b8] sm:$0xff] %v1413
    %1542 = vst [vmem:[#allocation5 + $0x3c0] sm:$0xff] %v1414
    %1543 = vst [vmem:[#allocation5 + $0x3c8] sm:$0xff] %v1415
    %1544 = vst [vmem:[#allocation5 + $0x3d0] sm:$0xff] %v1416
    %1545 = vst [vmem:[#allocation5 + $0x3d8] sm:$0xff] %v1417
    %1546 = vst [vmem:[#allocation5 + $0x3e0] sm:$0xff] %v1418
    %1547 = vst [vmem:[#allocation5 + $0x3e8] sm:$0xff] %v1419
    %1548 = vst [vmem:[#allocation5 + $0x3f0] sm:$0xff] %v1420
    %1549 = vst [vmem:[#allocation5 + $0x3f8] sm:$0xff] %v1421
    // Predicated region
    $region26: #{tpu_custom_call.1} parent=1 // pred_check
      _
    $region27: #{tpu_custom_call.1} parent=1 // pred_check_branch
      %1551 = sbr.rel (0) target = $region29
    $region28: #{tpu_custom_call.1} parent=1 // pred_region
      %s1553 = ssub.s32 16384, 16384
      %1554 = vsyncadd [#allocation4], %s1553
      %s1555 = sshll.u32 [#allocation5], 4
      %s1556 = int_to_ptr.vmem [resolvable:$true] %s1555
      %1561 = dma.vmem_to_hbm [thread:$0]  %s1556, 16384, %s5, [#allocation4], 256, 256, 16
    $region29: #{tpu_custom_call.1} parent=1 // pred_fallthru
      _
    // Predicated region
    $region30: #{tpu_custom_call.1} parent=1 // pred_check
      _
    $region31: #{tpu_custom_call.1} parent=1 // pred_check_branch
      %1563 = sbr.rel (0) target = $region33
    $region32: #{tpu_custom_call.1} parent=1 // pred_region
      %1564 = dma.done [#allocation4], 16384
    $region33: #{tpu_custom_call.1} parent=1 // pred_fallthru
      _
    %1565 = vsyncpa [#allocation3], 1
    %1566 = vsyncpa [#allocation4], 1

</llo_original>
